<compile_context>
chip_gen: v6e
topology: v6e:2x2x1
jax: 0.10.0
libtpu: 0.0.40
codegen_flags: <defaults>
</compile_context>

<pallas_src>
import functools

import jax
import jax.numpy as jnp
from jax.experimental import pallas as pl
from jax.experimental.pallas import tpu as pltpu


def _flash_attn_kernel(gamma_ref,     # SMEM (1,)
                       xq_ref,        # (1, C, TQ)  x tile for the query rows
                       xkv_ref,       # (1, C, TK)  x tile for the key/value cols
                       xres_ref,      # (1, TQ, C)  raw-view residual tile
                       wqt_ref,       # (C, Cq)     Wq^T
                       bq_ref,        # (1, Cq)
                       wkv_ref,       # (C+Cq, C)   fused [Wv; Wk] slab
                       bkv_ref,       # (C+Cq, 1)   fused [bv; bk]
                       o_ref,         # (1, TQ, C)
                       q_sc,          # VMEM (TQ, Cq)
                       m_sc,          # VMEM (TQ, 1)
                       l_sc,          # VMEM (TQ, 1)
                       acc_sc,        # VMEM (TQ, C)
                       *, compute_dtype):
    ki = pl.program_id(2)
    nk = pl.num_programs(2)
    C = xq_ref.shape[1]

    @pl.when(ki == 0)
    def _init():
        # Project the query tile once per (batch, q-tile):  q = x_q^T @ Wq^T + bq
        xq_t = xq_ref[0].T                                        # (TQ, C)
        q_sc[...] = (jnp.dot(xq_t, wqt_ref[...],
                             preferred_element_type=jnp.float32)
                     + bq_ref[...])                               # (TQ, Cq)
        m_sc[...] = jnp.full_like(m_sc, -jnp.inf)
        l_sc[...] = jnp.zeros_like(l_sc)
        acc_sc[...] = jnp.zeros_like(acc_sc)

    # Fused K/V projection for this kv tile: single MXU matmul, lanes = TK.
    kvt = (jnp.dot(wkv_ref[...], xkv_ref[0],
                   preferred_element_type=jnp.float32)
           + bkv_ref[...])                                        # (C+Cq, TK)
    v_t = kvt[:C, :]                                              # (C,  TK)
    k_t = kvt[C:, :]                                              # (Cq, TK)

    # logits tile:  s[i, j] = sum_cq q[i, cq] * k_t[cq, j]
    q = q_sc[...]
    s = jnp.dot(q.astype(compute_dtype), k_t.astype(compute_dtype),
                preferred_element_type=jnp.float32)               # (TQ, TK)

    # Online (numerically stable) softmax accumulation.
    m_prev = m_sc[...]
    m_new = jnp.maximum(m_prev, jnp.max(s, axis=-1, keepdims=True))
    alpha = jnp.exp(m_prev - m_new)
    p = jnp.exp(s - m_new)                                        # (TQ, TK)
    l_sc[...] = alpha * l_sc[...] + jnp.sum(p, axis=-1, keepdims=True)
    acc_sc[...] = alpha * acc_sc[...] + jnp.dot(
        p.astype(compute_dtype), v_t.T.astype(compute_dtype),
        preferred_element_type=jnp.float32)                       # (TQ, C)
    m_sc[...] = m_new

    @pl.when(ki == nk - 1)
    def _finalize():
        inv_l = pl.reciprocal(l_sc[...], approx=True)             # EUP slot
        out = acc_sc[...] * inv_l                                 # (TQ, C)
        o_ref[0] = (gamma_ref[0] * out + xres_ref[0]).astype(o_ref.dtype)


def _pick_tile(n):
    # Largest convenient tile that divides N; 512 rows keeps the working set a
    # few MiB — comfortably inside v7x's 32 MiB scoped-VMEM default.
    for t in (512, 256, 128):
        if n % t == 0:
            return t
    return n  # fall back to a single tile spanning all of N


def attention_block(x, params, *, compute_dtype=jnp.float32):
    """x: (B, C, D, H, W) float32.  Returns (B, C, D, H, W)."""
    wq, bq, wk, bk, wv, bv, gamma = params
    B, C, D, H, W = x.shape
    N = D * H * W
    Cq = wq.shape[0]

    TQ = _pick_tile(N)
    TK = TQ
    nq, nk = N // TQ, N // TK

    # Free reshapes of the NCDHW buffer (no HBM transpose):
    #   x_cn : (B, C, N) — channels on sublanes, N lane-dense, for projections.
    #   x_res: (B, N, C) — raw reinterpretation, matches torch's .view residual.
    x_cn = x.reshape(B, C, N)
    x_res = x.reshape(B, N, C)

    wq_t = wq.T                                   # (C, Cq)
    bq_row = bq.reshape(1, Cq)
    w_kv = jnp.concatenate([wv, wk], axis=0)      # (C+Cq, C) fused slab
    b_kv = jnp.concatenate([bv, bk]).reshape(C + Cq, 1)

    kernel = functools.partial(_flash_attn_kernel, compute_dtype=compute_dtype)

    out = pl.pallas_call(
        kernel,
        out_shape=jax.ShapeDtypeStruct((B, N, C), jnp.float32),
        grid_spec=pltpu.PrefetchScalarGridSpec(
            num_scalar_prefetch=0,
            grid=(B, nq, nk),
            in_specs=[
                pl.BlockSpec(memory_space=pltpu.MemorySpace.SMEM),        # gamma
                pl.BlockSpec((1, C, TQ), lambda b, qi, ki: (b, 0, qi)),   # x (q rows)
                pl.BlockSpec((1, C, TK), lambda b, qi, ki: (b, 0, ki)),   # x (kv cols)
                pl.BlockSpec((1, TQ, C), lambda b, qi, ki: (b, qi, 0)),   # residual
                pl.BlockSpec((C, Cq), lambda b, qi, ki: (0, 0)),          # Wq^T (resident)
                pl.BlockSpec((1, Cq), lambda b, qi, ki: (0, 0)),          # bq
                pl.BlockSpec((C + Cq, C), lambda b, qi, ki: (0, 0)),      # [Wv; Wk]
                pl.BlockSpec((C + Cq, 1), lambda b, qi, ki: (0, 0)),      # [bv; bk]
            ],
            out_specs=pl.BlockSpec((1, TQ, C), lambda b, qi, ki: (b, qi, 0)),
            scratch_shapes=[
                pltpu.VMEM((TQ, Cq), jnp.float32),   # cached q tile
                pltpu.VMEM((TQ, 1), jnp.float32),    # running max
                pltpu.VMEM((TQ, 1), jnp.float32),    # running sum
                pltpu.VMEM((TQ, C), jnp.float32),    # output accumulator
            ],
        ),
        compiler_params=pltpu.CompilerParams(
            dimension_semantics=("parallel", "parallel", "arbitrary")),
    )(gamma, x_cn, x_cn, x_res, wq_t, bq_row, w_kv, b_kv)

    # Raw reinterpretation, identical to torch `out.view(batch, -1, d, h, w)`.
    return out.reshape(B, C, D, H, W)


def reference(x, params):
    """Pure-JAX replica of the PyTorch forward, for verification."""
    wq, bq, wk, bk, wv, bv, gamma = params
    B, C, D, H, W = x.shape
    N = D * H * W
    xf = x.reshape(B, C, N)
    q = jnp.einsum('oc,bcn->bon', wq, xf) + bq[None, :, None]
    k = jnp.einsum('oc,bcn->bon', wk, xf) + bk[None, :, None]
    v = jnp.einsum('oc,bcn->bon', wv, xf) + bv[None, :, None]
    attn = jax.nn.softmax(jnp.einsum('bcn,bcm->bnm', q, k), axis=-1)
    out = jnp.einsum('bnm,bcm->bnc', attn, v)          # (B, N, C)
    out = out.reshape(B, C, D, H, W)                   # raw view, like torch
    return gamma * out + x


if __name__ == "__main__":
    B, C, div = 2, 8, 2
    D, H, W = 6, 8, 8                 # N = 384 -> 3 q-tiles x 3 kv-tiles (TQ=TK=128)
    Cq = C // div

    key = jax.random.PRNGKey(0)
    kx, k1, k2, k3, k4, k5, k6 = jax.random.split(key, 7)

    x = jax.random.normal(kx, (B, C, D, H, W), dtype=jnp.float32)

    # Conv3d k=1 weights squeezed to (Cout, Cin).
    wq = 0.1 * jax.random.normal(k1, (Cq, C), dtype=jnp.float32)
    bq = 0.1 * jax.random.normal(k2, (Cq,), dtype=jnp.float32)
    wk = 0.1 * jax.random.normal(k3, (Cq, C), dtype=jnp.float32)
    bk = 0.1 * jax.random.normal(k4, (Cq,), dtype=jnp.float32)
    wv = 0.1 * jax.random.normal(k5, (C, C), dtype=jnp.float32)
    bv = 0.1 * jax.random.normal(k6, (C,), dtype=jnp.float32)
    # PyTorch __init__ sets gamma = 0 (which would trivially return x);
    # use a nonzero deterministic value so the attention path is exercised.
    gamma = jnp.array([0.5], dtype=jnp.float32)

    params = (wq, bq, wk, bk, wv, bv, gamma)

    y = attention_block(x, params)
    y = jax.block_until_ready(y)

    y_ref = reference(x, params)
    assert y.shape == x.shape
    # Tolerance loosened slightly vs exact f32 because the softmax normalizer
    # uses the EUP approximate reciprocal (pl.reciprocal(..., approx=True)).
    assert jnp.allclose(y, y_ref, atol=2e-3, rtol=2e-3), \
        f"max err {jnp.max(jnp.abs(y - y_ref))}"

    print("KERNEL_OK")
</pallas_src>

<mosaic_0001>
module attributes {stable_mosaic.version = 11 : i64} {
  func.func @_flash_attn_kernel(%arg0: i32, %arg1: i32, %arg2: i32, %arg3: memref<1xf32, #tpu.memory_space<smem>>, %arg4: memref<1x8x128xf32, #tpu.memory_space<vmem>>, %arg5: memref<1x8x128xf32, #tpu.memory_space<vmem>>, %arg6: memref<1x128x8xf32, #tpu.memory_space<vmem>>, %arg7: memref<8x4xf32, #tpu.memory_space<vmem>>, %arg8: memref<1x4xf32, #tpu.memory_space<vmem>>, %arg9: memref<12x8xf32, #tpu.memory_space<vmem>>, %arg10: memref<12x1xf32, #tpu.memory_space<vmem>>, %arg11: memref<1x128x8xf32, #tpu.memory_space<vmem>>, %arg12: memref<128x4xf32, #tpu.memory_space<vmem>>, %arg13: memref<128x1xf32, #tpu.memory_space<vmem>>, %arg14: memref<128x1xf32, #tpu.memory_space<vmem>>, %arg15: memref<128x8xf32, #tpu.memory_space<vmem>>) attributes {dimension_semantics = [#tpu.dimension_semantics<parallel>, #tpu.dimension_semantics<parallel>, #tpu.dimension_semantics<arbitrary>], iteration_bounds = array<i64: 2, 3, 3>, scalar_prefetch = 0 : i64, scratch_operands = 4 : i64, tpu.core_type = #tpu.core_type<tc>, window_params = [{transform_indices = @transform_0, window_bounds = array<i64: 1>}, {transform_indices = @transform_1, window_bounds = array<i64: 1, 8, 128>}, {transform_indices = @transform_2, window_bounds = array<i64: 1, 8, 128>}, {transform_indices = @transform_3, window_bounds = array<i64: 1, 128, 8>}, {pipeline_mode = #tpu.pipeline_mode<synchronous>, transform_indices = @transform_4, window_bounds = array<i64: 8, 4>}, {pipeline_mode = #tpu.pipeline_mode<synchronous>, transform_indices = @transform_5, window_bounds = array<i64: 1, 4>}, {pipeline_mode = #tpu.pipeline_mode<synchronous>, transform_indices = @transform_6, window_bounds = array<i64: 12, 8>}, {pipeline_mode = #tpu.pipeline_mode<synchronous>, transform_indices = @transform_7, window_bounds = array<i64: 12, 1>}, {transform_indices = @transform_8, window_bounds = array<i64: 1, 128, 8>}]} {
    %c0_i32 = arith.constant 0 : i32
    %0 = arith.cmpi eq, %arg2, %c0_i32 : i32
    %1 = arith.extui %0 : i1 to i32
    %c0_i32_0 = arith.constant 0 : i32
    %2 = arith.cmpi ne, %1, %c0_i32_0 : i32
    scf.if %2 {
      %c0_26 = arith.constant 0 : index
      %c0_27 = arith.constant 0 : index
      %c0_28 = arith.constant 0 : index
      %40 = vector.load %arg4[%c0_26, %c0_27, %c0_28] : memref<1x8x128xf32, #tpu.memory_space<vmem>>, vector<1x8x128xf32>
      %41 = vector.shape_cast %40 : vector<1x8x128xf32> to vector<8x128xf32>
      %42 = tpu.transpose %41, [1, 0] : vector<8x128xf32> -> vector<128x8xf32>
      %c0_29 = arith.constant 0 : index
      %c0_30 = arith.constant 0 : index
      %43 = vector.load %arg7[%c0_29, %c0_30] : memref<8x4xf32, #tpu.memory_space<vmem>>, vector<8x4xf32>
      %cst_31 = arith.constant dense<0.000000e+00> : vector<128x4xf32>
      %44 = tpu.matmul %42, %43, %cst_31 {dimension_numbers = #tpu.dot_dimension_numbers<[1], [0], [0], [1], [0, 0, 1, 1], [], []>} : vector<128x8xf32>, vector<8x4xf32>, vector<128x4xf32> -> vector<128x4xf32>
      %c0_32 = arith.constant 0 : index
      %c0_33 = arith.constant 0 : index
      %45 = vector.load %arg8[%c0_32, %c0_33] : memref<1x4xf32, #tpu.memory_space<vmem>>, vector<1x4xf32>
      %46 = vector.broadcast %45 : vector<1x4xf32> to vector<128x4xf32>
      %47 = arith.addf %44, %46 : vector<128x4xf32>
      %c0_34 = arith.constant 0 : index
      %c0_35 = arith.constant 0 : index
      %48 = vector.load %arg12[%c0_34, %c0_35] : memref<128x4xf32, #tpu.memory_space<vmem>>, vector<128x4xf32>
      tpu.vector_store %arg12[%c0_34, %c0_35], %47 {strides = array<i32>} : memref<128x4xf32, #tpu.memory_space<vmem>>, vector<128x4xf32>,
      %cst_36 = arith.constant 0xFF800000 : f32
      %49 = vector.broadcast %cst_36 : f32 to vector<128x1xf32>
      %c0_37 = arith.constant 0 : index
      %c0_38 = arith.constant 0 : index
      %50 = vector.load %arg13[%c0_37, %c0_38] : memref<128x1xf32, #tpu.memory_space<vmem>>, vector<128x1xf32>
      tpu.vector_store %arg13[%c0_37, %c0_38], %49 {strides = array<i32>} : memref<128x1xf32, #tpu.memory_space<vmem>>, vector<128x1xf32>,
      %cst_39 = arith.constant 0.000000e+00 : f32
      %51 = vector.broadcast %cst_39 : f32 to vector<128x1xf32>
      %c0_40 = arith.constant 0 : index
      %c0_41 = arith.constant 0 : index
      %52 = vector.load %arg14[%c0_40, %c0_41] : memref<128x1xf32, #tpu.memory_space<vmem>>, vector<128x1xf32>
      tpu.vector_store %arg14[%c0_40, %c0_41], %51 {strides = array<i32>} : memref<128x1xf32, #tpu.memory_space<vmem>>, vector<128x1xf32>,
      %cst_42 = arith.constant 0.000000e+00 : f32
      %53 = vector.broadcast %cst_42 : f32 to vector<128x8xf32>
      %c0_43 = arith.constant 0 : index
      %c0_44 = arith.constant 0 : index
      %54 = vector.load %arg15[%c0_43, %c0_44] : memref<128x8xf32, #tpu.memory_space<vmem>>, vector<128x8xf32>
      tpu.vector_store %arg15[%c0_43, %c0_44], %53 {strides = array<i32>} : memref<128x8xf32, #tpu.memory_space<vmem>>, vector<128x8xf32>,
    } else {
    }
    %c0 = arith.constant 0 : index
    %c0_1 = arith.constant 0 : index
    %3 = vector.load %arg9[%c0, %c0_1] : memref<12x8xf32, #tpu.memory_space<vmem>>, vector<12x8xf32>
    %c0_2 = arith.constant 0 : index
    %c0_3 = arith.constant 0 : index
    %c0_4 = arith.constant 0 : index
    %4 = vector.load %arg5[%c0_2, %c0_3, %c0_4] : memref<1x8x128xf32, #tpu.memory_space<vmem>>, vector<1x8x128xf32>
    %5 = vector.shape_cast %4 : vector<1x8x128xf32> to vector<8x128xf32>
    %cst = arith.constant dense<0.000000e+00> : vector<12x128xf32>
    %6 = tpu.matmul %3, %5, %cst {dimension_numbers = #tpu.dot_dimension_numbers<[1], [0], [0], [1], [0, 0, 1, 1], [], []>} : vector<12x8xf32>, vector<8x128xf32>, vector<12x128xf32> -> vector<12x128xf32>
    %c0_5 = arith.constant 0 : index
    %c0_6 = arith.constant 0 : index
    %7 = vector.load %arg10[%c0_5, %c0_6] : memref<12x1xf32, #tpu.memory_space<vmem>>, vector<12x1xf32>
    %8 = vector.broadcast %7 : vector<12x1xf32> to vector<12x128xf32>
    %9 = arith.addf %6, %8 : vector<12x128xf32>
    %10 = vector.extract_strided_slice %9 {offsets = [0, 0], sizes = [8, 128], strides = [1, 1]} : vector<12x128xf32> to vector<8x128xf32>
    %11 = vector.extract_strided_slice %9 {offsets = [8, 0], sizes = [4, 128], strides = [1, 1]} : vector<12x128xf32> to vector<4x128xf32>
    %c0_7 = arith.constant 0 : index
    %c0_8 = arith.constant 0 : index
    %12 = vector.load %arg12[%c0_7, %c0_8] : memref<128x4xf32, #tpu.memory_space<vmem>>, vector<128x4xf32>
    %cst_9 = arith.constant dense<0.000000e+00> : vector<128x128xf32>
    %13 = tpu.matmul %12, %11, %cst_9 {dimension_numbers = #tpu.dot_dimension_numbers<[1], [0], [0], [1], [0, 0, 1, 1], [], []>} : vector<128x4xf32>, vector<4x128xf32>, vector<128x128xf32> -> vector<128x128xf32>
    %c0_10 = arith.constant 0 : index
    %c0_11 = arith.constant 0 : index
    %14 = vector.load %arg13[%c0_10, %c0_11] : memref<128x1xf32, #tpu.memory_space<vmem>>, vector<128x1xf32>
    %cst_12 = arith.constant dense<0xFF800000> : vector<128xf32>
    %15 = vector.multi_reduction <maximumf>, %13, %cst_12 [1] : vector<128x128xf32> to vector<128xf32>
    %16 = vector.shape_cast %15 : vector<128xf32> to vector<128x1xf32>
    %17 = arith.maximumf %14, %16 : vector<128x1xf32>
    %18 = arith.subf %14, %17 : vector<128x1xf32>
    %19 = math.exp %18 : vector<128x1xf32>
    %20 = vector.broadcast %17 : vector<128x1xf32> to vector<128x128xf32>
    %21 = arith.subf %13, %20 : vector<128x128xf32>
    %22 = math.exp %21 : vector<128x128xf32>
    %c0_13 = arith.constant 0 : index
    %c0_14 = arith.constant 0 : index
    %23 = vector.load %arg14[%c0_13, %c0_14] : memref<128x1xf32, #tpu.memory_space<vmem>>, vector<128x1xf32>
    %24 = arith.mulf %19, %23 : vector<128x1xf32>
    %cst_15 = arith.constant dense<0.000000e+00> : vector<128xf32>
    %25 = vector.multi_reduction <add>, %22, %cst_15 [1] : vector<128x128xf32> to vector<128xf32>
    %26 = vector.shape_cast %25 : vector<128xf32> to vector<128x1xf32>
    %27 = arith.addf %24, %26 : vector<128x1xf32>
    %c0_16 = arith.constant 0 : index
    %c0_17 = arith.constant 0 : index
    %28 = vector.load %arg14[%c0_16, %c0_17] : memref<128x1xf32, #tpu.memory_space<vmem>>, vector<128x1xf32>
    tpu.vector_store %arg14[%c0_16, %c0_17], %27 {strides = array<i32>} : memref<128x1xf32, #tpu.memory_space<vmem>>, vector<128x1xf32>,
    %c0_18 = arith.constant 0 : index
    %c0_19 = arith.constant 0 : index
    %29 = vector.load %arg15[%c0_18, %c0_19] : memref<128x8xf32, #tpu.memory_space<vmem>>, vector<128x8xf32>
    %30 = vector.broadcast %19 : vector<128x1xf32> to vector<128x8xf32>
    %31 = arith.mulf %30, %29 : vector<128x8xf32>
    %32 = tpu.transpose %10, [1, 0] : vector<8x128xf32> -> vector<128x8xf32>
    %cst_20 = arith.constant dense<0.000000e+00> : vector<128x8xf32>
    %33 = tpu.matmul %22, %32, %cst_20 {dimension_numbers = #tpu.dot_dimension_numbers<[1], [0], [0], [1], [0, 0, 1, 1], [], []>} : vector<128x128xf32>, vector<128x8xf32>, vector<128x8xf32> -> vector<128x8xf32>
    %34 = arith.addf %31, %33 : vector<128x8xf32>
    %c0_21 = arith.constant 0 : index
    %c0_22 = arith.constant 0 : index
    %35 = vector.load %arg15[%c0_21, %c0_22] : memref<128x8xf32, #tpu.memory_space<vmem>>, vector<128x8xf32>
    tpu.vector_store %arg15[%c0_21, %c0_22], %34 {strides = array<i32>} : memref<128x8xf32, #tpu.memory_space<vmem>>, vector<128x8xf32>,
    %c0_23 = arith.constant 0 : index
    %c0_24 = arith.constant 0 : index
    %36 = vector.load %arg13[%c0_23, %c0_24] : memref<128x1xf32, #tpu.memory_space<vmem>>, vector<128x1xf32>
    tpu.vector_store %arg13[%c0_23, %c0_24], %17 {strides = array<i32>} : memref<128x1xf32, #tpu.memory_space<vmem>>, vector<128x1xf32>,
    %c2_i32 = arith.constant 2 : i32
    %37 = arith.cmpi eq, %arg2, %c2_i32 : i32
    %38 = arith.extui %37 : i1 to i32
    %c0_i32_25 = arith.constant 0 : i32
    %39 = arith.cmpi ne, %38, %c0_i32_25 : i32
    scf.if %39 {
      %c0_26 = arith.constant 0 : index
      %c0_27 = arith.constant 0 : index
      %40 = vector.load %arg14[%c0_26, %c0_27] : memref<128x1xf32, #tpu.memory_space<vmem>>, vector<128x1xf32>
      %41 = tpu.reciprocal %40 {approx = true} : vector<128x1xf32> -> vector<128x1xf32>
      %c0_28 = arith.constant 0 : index
      %c0_29 = arith.constant 0 : index
      %42 = vector.load %arg15[%c0_28, %c0_29] : memref<128x8xf32, #tpu.memory_space<vmem>>, vector<128x8xf32>
      %43 = vector.broadcast %41 : vector<128x1xf32> to vector<128x8xf32>
      %44 = arith.mulf %42, %43 : vector<128x8xf32>
      %c0_30 = arith.constant 0 : index
      %45 = memref.load %arg3[%c0_30] : memref<1xf32, #tpu.memory_space<smem>>
      %46 = vector.broadcast %45 : f32 to vector<128x8xf32>
      %47 = arith.mulf %46, %44 : vector<128x8xf32>
      %c0_31 = arith.constant 0 : index
      %c0_32 = arith.constant 0 : index
      %c0_33 = arith.constant 0 : index
      %48 = vector.load %arg6[%c0_31, %c0_32, %c0_33] : memref<1x128x8xf32, #tpu.memory_space<vmem>>, vector<1x128x8xf32>
      %49 = vector.shape_cast %48 : vector<1x128x8xf32> to vector<128x8xf32>
      %50 = arith.addf %47, %49 : vector<128x8xf32>
      %c0_34 = arith.constant 0 : index
      %c0_35 = arith.constant 0 : index
      %c0_36 = arith.constant 0 : index
      %51 = vector.load %arg11[%c0_34, %c0_35, %c0_36] : memref<1x128x8xf32, #tpu.memory_space<vmem>>, vector<1x128x8xf32>
      %52 = vector.shape_cast %51 : vector<1x128x8xf32> to vector<128x8xf32>
      %53 = vector.shape_cast %50 : vector<128x8xf32> to vector<1x128x8xf32>
      tpu.vector_store %arg11[%c0_34, %c0_35, %c0_36], %53 {strides = array<i32>} : memref<1x128x8xf32, #tpu.memory_space<vmem>>, vector<1x128x8xf32>,
    } else {
    }
    return
  }
  func.func @transform_0(%arg0: i32, %arg1: i32, %arg2: i32) -> i32 {
    %c0_i32 = arith.constant 0 : i32
    %c0_i32_0 = arith.constant 0 : i32
    return %c0_i32 : i32
  }
  func.func @transform_1(%arg0: i32, %arg1: i32, %arg2: i32) -> (i32, i32, i32) {
    %c0_i32 = arith.constant 0 : i32
    %c0_i32_0 = arith.constant 0 : i32
    return %arg0, %c0_i32, %arg1 : i32, i32, i32
  }
  func.func @transform_2(%arg0: i32, %arg1: i32, %arg2: i32) -> (i32, i32, i32) {
    %c0_i32 = arith.constant 0 : i32
    %c0_i32_0 = arith.constant 0 : i32
    return %arg0, %c0_i32, %arg2 : i32, i32, i32
  }
  func.func @transform_3(%arg0: i32, %arg1: i32, %arg2: i32) -> (i32, i32, i32) {
    %c0_i32 = arith.constant 0 : i32
    %c0_i32_0 = arith.constant 0 : i32
    return %arg0, %arg1, %c0_i32 : i32, i32, i32
  }
  func.func @transform_4(%arg0: i32, %arg1: i32, %arg2: i32) -> (i32, i32) {
    %c0_i32 = arith.constant 0 : i32
    %c0_i32_0 = arith.constant 0 : i32
    %c0_i32_1 = arith.constant 0 : i32
    return %c0_i32, %c0_i32_0 : i32, i32
  }
  func.func @transform_5(%arg0: i32, %arg1: i32, %arg2: i32) -> (i32, i32) {
    %c0_i32 = arith.constant 0 : i32
    %c0_i32_0 = arith.constant 0 : i32
    %c0_i32_1 = arith.constant 0 : i32
    return %c0_i32, %c0_i32_0 : i32, i32
  }
  func.func @transform_6(%arg0: i32, %arg1: i32, %arg2: i32) -> (i32, i32) {
    %c0_i32 = arith.constant 0 : i32
    %c0_i32_0 = arith.constant 0 : i32
    %c0_i32_1 = arith.constant 0 : i32
    return %c0_i32, %c0_i32_0 : i32, i32
  }
  func.func @transform_7(%arg0: i32, %arg1: i32, %arg2: i32) -> (i32, i32) {
    %c0_i32 = arith.constant 0 : i32
    %c0_i32_0 = arith.constant 0 : i32
    %c0_i32_1 = arith.constant 0 : i32
    return %c0_i32, %c0_i32_0 : i32, i32
  }
  func.func @transform_8(%arg0: i32, %arg1: i32, %arg2: i32) -> (i32, i32, i32) {
    %c0_i32 = arith.constant 0 : i32
    %c0_i32_0 = arith.constant 0 : i32
    return %arg0, %arg1, %c0_i32 : i32, i32, i32
  }
}

</mosaic_0001>

<llo_original>
// kernel: tpu_custom_call.1
$region0: #{tpu_custom_call.1}
  #allocation0 [shape = 'u32[]', space=smem, size = 0x4, offset = 0x4, fixed_abs, tag = 'smem constant byte address 0x4 - core index']
  #allocation1 [shape = 'u32[144,128]{1,0:T(1,128)}', space=vmem, size = 0x12000, scoped, tag = 'internal scratch']
  #allocation2 [shape = 'f32[128,4]{1,0:T(8,128)}', space=vmem, size = 0x10000, scoped, tag = 'scratch operand']
  #allocation3 [shape = 'f32[128,1]{1,0:T(8,128)}', space=vmem, size = 0x10000, scoped, tag = 'scratch operand']
  #allocation4 [shape = 'f32[128,1]{1,0:T(8,128)}', space=vmem, size = 0x10000, scoped, tag = 'scratch operand']
  #allocation5 [shape = 'f32[128,8]{1,0:T(8,128)}', space=vmem, size = 0x10000, scoped, tag = 'scratch operand']
  #allocation6 [shape = 'f32[1]{0:T(128)S(6)}', space=smem, size = 0x200, scoped, tag = 'scoped memory for tpu_custom_call.1']
  %s0 = inlined_call_operand.<no memory space> [shape: f32[1], index: 0, kind: input, shape index: {}]
  %s1 = inlined_call_operand.vmem [shape: f32[2,8,384], index: 1, kind: input, shape index: {}]
  %s2 = inlined_call_operand.vmem [shape: f32[2,8,384], index: 2, kind: input, shape index: {}]
  %s3 = inlined_call_operand.vmem [shape: f32[2,384,8], index: 3, kind: input, shape index: {}]
  %s4 = inlined_call_operand.vmem [shape: f32[8,4], index: 4, kind: input, shape index: {}]
  %s5 = inlined_call_operand.vmem [shape: f32[1,4], index: 5, kind: input, shape index: {}]
  %s6 = inlined_call_operand.vmem [shape: f32[12,8], index: 6, kind: input, shape index: {}]
  %s7 = inlined_call_operand.vmem [shape: f32[12,1], index: 7, kind: input, shape index: {}]
  %s8 = inlined_call_operand.vmem [shape: f32[2,384,8], index: 8, kind: output, shape index: {}]
  %s9 = sld [smem:[#allocation0]]
  $region73: #{tpu_custom_call.1} parent=0
    _
  %s11 = ssub.s32 1, %s9
  %s12 = scalar_select 0, %s11, %s9
  %13 = sst [smem:[#allocation6]] %s0
  loop: start=0, step=1, limit=20
  $region2: #{tpu_custom_call.1} parent=0 // loop_pre_header
    _
  $region3: #{tpu_custom_call.1} parent=0 // loop_header
    %s15 = sphi 0, %s19
    %p16 = scmp.ge.s32.totalorder %s15, 20
    %s22 = sphi 0, %s41
    %s23 = sphi 0, %s37
    %s24 = sphi 0, %s33
    %s25 = sphi 0, %s22
    %s26 = sphi 0, %s23
    %s27 = sphi 0, %s24
    %s28 = sphi 0, %s25
    %s29 = sphi 0, %s26
    %s30 = sphi 0, %s27
    %s42 = sphi 0, %s42
    %s44 = sphi 0, %s42
    %s45 = sphi 0, %s44
    %s59 = sphi 0, %s45
    %s67 = sphi 0, %s69
    %s70 = sphi 0, %s67
    %s71 = sphi 0, %s70
    %s87 = sphi 0, %s71
    %s95 = sphi 0, %s97
    %s98 = sphi 0, %s95
    %s99 = sphi 0, %s98
    %s115 = sphi 0, %s99
    %s123 = sphi 0, %s125
    %s126 = sphi 0, %s123
    %s127 = sphi 0, %s126
    %s143 = sphi 0, %s127
    %s147 = sphi 0, %s147
    %s149 = sphi 0, %s147
    %s150 = sphi 0, %s149
    %s164 = sphi 0, %s150
    %s168 = sphi 0, %s168
    %s170 = sphi 0, %s168
    %s171 = sphi 0, %s170
    %s185 = sphi 0, %s171
    %s189 = sphi 0, %s189
    %s191 = sphi 0, %s189
    %s192 = sphi 0, %s191
    %s206 = sphi 0, %s192
    %s210 = sphi 0, %s210
    %s212 = sphi 0, %s210
    %s213 = sphi 0, %s212
    %s227 = sphi 0, %s213
    %s235 = sphi 0, %s237
    %s238 = sphi 0, %s235
    %s239 = sphi 0, %s238
    %s255 = sphi 0, %s239
  $region4: #{tpu_custom_call.1} parent=0 // loop_header_branch
    %18 = sbr.rel (%p16) target = $region8
  $region5: #{tpu_custom_call.1} parent=0 // loop_body
    %s20 = ssub.s32 %s15, 1
    %s21 = ssub.s32 %s15, 2
    %s31 = sadd.s32 1, %s24
    %p32 = scmp.ge.s32.totalorder %s31, 3
    %s33 = scalar_select %p32, 0, %s31
    %s34 = sadd.s32 1, %s23
    %s35 = scalar_select %p32, %s34, %s23
    %p36 = scmp.ge.s32.totalorder %s35, 3
    %s37 = scalar_select %p36, 0, %s35
    %s38 = sadd.s32 1, %s22
    %s39 = scalar_select %p36, %s38, %s22
    %p40 = scmp.ge.s32.totalorder %s39, 2
    %s41 = scalar_select %p40, 0, %s39
    %s43 = sadd.s32 %s42, 1
    %p46 = scmp.eq.s32.totalorder %s15, 17
    %p47 = scmp.ne.s32.totalorder %s42, %s44
    %p48 = scmp.eq.s32.totalorder %s15, 0
    %p49 = por %p47, %p48
    %p50 = scmp.ne.s32.totalorder %s42, %s44
    %p51 = scmp.eq.s32.totalorder %s20, 17
    %p52 = por %p50, %p51
    %p53 = scmp.ne.s32.totalorder %s44, %s45
    %p54 = scmp.eq.s32.totalorder %s20, 0
    %p55 = por %p53, %p54
    %p56 = scmp.ne.s32.totalorder %s44, %s45
    %p57 = scmp.eq.s32.totalorder %s21, 17
    %p58 = por %p56, %p57
    %p60 = scmp.ne.s32.totalorder %s45, %s59
    %p61 = scmp.eq.s32.totalorder %s21, 0
    %p62 = por %p60, %p61
    %s63 = ssub.s32 %s22, %s41
    %s64 = ssub.s32 %s23, %s37
    %s65 = sor.u32 %s63, %s64
    %p66 = scmp.eq.s32.totalorder %s65, 0
    %s68 = sadd.s32 %s67, 1
    %s69 = scalar_select %p66, %s67, %s68
    %p72 = pneg %p66
    %p73 = scmp.eq.s32.totalorder %s15, 17
    %p74 = por %p72, %p73
    %p75 = scmp.ne.s32.totalorder %s67, %s70
    %p76 = scmp.eq.s32.totalorder %s15, 0
    %p77 = por %p75, %p76
    %p78 = scmp.ne.s32.totalorder %s67, %s70
    %p79 = scmp.eq.s32.totalorder %s20, 17
    %p80 = por %p78, %p79
    %p81 = scmp.ne.s32.totalorder %s70, %s71
    %p82 = scmp.eq.s32.totalorder %s20, 0
    %p83 = por %p81, %p82
    %p84 = scmp.ne.s32.totalorder %s70, %s71
    %p85 = scmp.eq.s32.totalorder %s21, 17
    %p86 = por %p84, %p85
    %p88 = scmp.ne.s32.totalorder %s71, %s87
    %p89 = scmp.eq.s32.totalorder %s21, 0
    %p90 = por %p88, %p89
    %s91 = ssub.s32 %s22, %s41
    %s92 = ssub.s32 %s24, %s33
    %s93 = sor.u32 %s91, %s92
    %p94 = scmp.eq.s32.totalorder %s93, 0
    %s96 = sadd.s32 %s95, 1
    %s97 = scalar_select %p94, %s95, %s96
    %p100 = pneg %p94
    %p101 = scmp.eq.s32.totalorder %s15, 17
    %p102 = por %p100, %p101
    %p103 = scmp.ne.s32.totalorder %s95, %s98
    %p104 = scmp.eq.s32.totalorder %s15, 0
    %p105 = por %p103, %p104
    %p106 = scmp.ne.s32.totalorder %s95, %s98
    %p107 = scmp.eq.s32.totalorder %s20, 17
    %p108 = por %p106, %p107
    %p109 = scmp.ne.s32.totalorder %s98, %s99
    %p110 = scmp.eq.s32.totalorder %s20, 0
    %p111 = por %p109, %p110
    %p112 = scmp.ne.s32.totalorder %s98, %s99
    %p113 = scmp.eq.s32.totalorder %s21, 17
    %p114 = por %p112, %p113
    %p116 = scmp.ne.s32.totalorder %s99, %s115
    %p117 = scmp.eq.s32.totalorder %s21, 0
    %p118 = por %p116, %p117
    %s119 = ssub.s32 %s22, %s41
    %s120 = ssub.s32 %s23, %s37
    %s121 = sor.u32 %s119, %s120
    %p122 = scmp.eq.s32.totalorder %s121, 0
    %s124 = sadd.s32 %s123, 1
    %s125 = scalar_select %p122, %s123, %s124
    %p128 = pneg %p122
    %p129 = scmp.eq.s32.totalorder %s15, 17
    %p130 = por %p128, %p129
    %p131 = scmp.ne.s32.totalorder %s123, %s126
    %p132 = scmp.eq.s32.totalorder %s15, 0
    %p133 = por %p131, %p132
    %p134 = scmp.ne.s32.totalorder %s123, %s126
    %p135 = scmp.eq.s32.totalorder %s20, 17
    %p136 = por %p134, %p135
    %p137 = scmp.ne.s32.totalorder %s126, %s127
    %p138 = scmp.eq.s32.totalorder %s20, 0
    %p139 = por %p137, %p138
    %p140 = scmp.ne.s32.totalorder %s126, %s127
    %p141 = scmp.eq.s32.totalorder %s21, 17
    %p142 = por %p140, %p141
    %p144 = scmp.ne.s32.totalorder %s127, %s143
    %p145 = scmp.eq.s32.totalorder %s21, 0
    %p146 = por %p144, %p145
    %s148 = sadd.s32 %s147, 1
    %p151 = scmp.eq.s32.totalorder %s15, 17
    %p152 = scmp.ne.s32.totalorder %s147, %s149
    %p153 = scmp.eq.s32.totalorder %s15, 0
    %p154 = por %p152, %p153
    %p155 = scmp.ne.s32.totalorder %s147, %s149
    %p156 = scmp.eq.s32.totalorder %s20, 17
    %p157 = por %p155, %p156
    %p158 = scmp.ne.s32.totalorder %s149, %s150
    %p159 = scmp.eq.s32.totalorder %s20, 0
    %p160 = por %p158, %p159
    %p161 = scmp.ne.s32.totalorder %s149, %s150
    %p162 = scmp.eq.s32.totalorder %s21, 17
    %p163 = por %p161, %p162
    %p165 = scmp.ne.s32.totalorder %s150, %s164
    %p166 = scmp.eq.s32.totalorder %s21, 0
    %p167 = por %p165, %p166
    %s169 = sadd.s32 %s168, 1
    %p172 = scmp.eq.s32.totalorder %s15, 17
    %p173 = scmp.ne.s32.totalorder %s168, %s170
    %p174 = scmp.eq.s32.totalorder %s15, 0
    %p175 = por %p173, %p174
    %p176 = scmp.ne.s32.totalorder %s168, %s170
    %p177 = scmp.eq.s32.totalorder %s20, 17
    %p178 = por %p176, %p177
    %p179 = scmp.ne.s32.totalorder %s170, %s171
    %p180 = scmp.eq.s32.totalorder %s20, 0
    %p181 = por %p179, %p180
    %p182 = scmp.ne.s32.totalorder %s170, %s171
    %p183 = scmp.eq.s32.totalorder %s21, 17
    %p184 = por %p182, %p183
    %p186 = scmp.ne.s32.totalorder %s171, %s185
    %p187 = scmp.eq.s32.totalorder %s21, 0
    %p188 = por %p186, %p187
    %s190 = sadd.s32 %s189, 1
    %p193 = scmp.eq.s32.totalorder %s15, 17
    %p194 = scmp.ne.s32.totalorder %s189, %s191
    %p195 = scmp.eq.s32.totalorder %s15, 0
    %p196 = por %p194, %p195
    %p197 = scmp.ne.s32.totalorder %s189, %s191
    %p198 = scmp.eq.s32.totalorder %s20, 17
    %p199 = por %p197, %p198
    %p200 = scmp.ne.s32.totalorder %s191, %s192
    %p201 = scmp.eq.s32.totalorder %s20, 0
    %p202 = por %p200, %p201
    %p203 = scmp.ne.s32.totalorder %s191, %s192
    %p204 = scmp.eq.s32.totalorder %s21, 17
    %p205 = por %p203, %p204
    %p207 = scmp.ne.s32.totalorder %s192, %s206
    %p208 = scmp.eq.s32.totalorder %s21, 0
    %p209 = por %p207, %p208
    %s211 = sadd.s32 %s210, 1
    %p214 = scmp.eq.s32.totalorder %s15, 17
    %p215 = scmp.ne.s32.totalorder %s210, %s212
    %p216 = scmp.eq.s32.totalorder %s15, 0
    %p217 = por %p215, %p216
    %p218 = scmp.ne.s32.totalorder %s210, %s212
    %p219 = scmp.eq.s32.totalorder %s20, 17
    %p220 = por %p218, %p219
    %p221 = scmp.ne.s32.totalorder %s212, %s213
    %p222 = scmp.eq.s32.totalorder %s20, 0
    %p223 = por %p221, %p222
    %p224 = scmp.ne.s32.totalorder %s212, %s213
    %p225 = scmp.eq.s32.totalorder %s21, 17
    %p226 = por %p224, %p225
    %p228 = scmp.ne.s32.totalorder %s213, %s227
    %p229 = scmp.eq.s32.totalorder %s21, 0
    %p230 = por %p228, %p229
    %s231 = ssub.s32 %s22, %s41
    %s232 = ssub.s32 %s23, %s37
    %s233 = sor.u32 %s231, %s232
    %p234 = scmp.eq.s32.totalorder %s233, 0
    %s236 = sadd.s32 %s235, 1
    %s237 = scalar_select %p234, %s235, %s236
    %p240 = pneg %p234
    %p241 = scmp.eq.s32.totalorder %s15, 17
    %p242 = por %p240, %p241
    %p243 = scmp.ne.s32.totalorder %s235, %s238
    %p244 = scmp.eq.s32.totalorder %s15, 0
    %p245 = por %p243, %p244
    %p246 = scmp.ne.s32.totalorder %s235, %s238
    %p247 = scmp.eq.s32.totalorder %s20, 17
    %p248 = por %p246, %p247
    %p249 = scmp.ne.s32.totalorder %s238, %s239
    %p250 = scmp.eq.s32.totalorder %s20, 0
    %p251 = por %p249, %p250
    %p252 = scmp.ne.s32.totalorder %s238, %s239
    %p253 = scmp.eq.s32.totalorder %s21, 17
    %p254 = por %p252, %p253
    %p256 = scmp.ne.s32.totalorder %s239, %s255
    %p257 = scmp.eq.s32.totalorder %s21, 0
    %p258 = por %p256, %p257
    %p259 = scmp.le.s32.totalorder 1, %s15
    %p260 = scmp.lt.s32.totalorder %s15, 19
    %p261 = pnand %p259, %p260
    %p262 = pneg %p261
    // Predicated region
    $region9: #{tpu_custom_call.1} parent=5 // pred_check
      _
    $region10: #{tpu_custom_call.1} parent=5 // pred_check_branch
      %264 = sbr.rel (%p261) target = $region12
    $region11: #{tpu_custom_call.1} parent=5 // pred_region
      %s265 = ssub.s32 %s15, 1
      // Predicated region
      $region13: #{tpu_custom_call.1} parent=11 // pred_check
        %p266 = pneg %p55
      $region14: #{tpu_custom_call.1} parent=11 // pred_check_branch
        %268 = sbr.rel (%p266) target = $region16
      $region15: #{tpu_custom_call.1} parent=11 // pred_region
        _
      $region16: #{tpu_custom_call.1} parent=11 // pred_fallthru
        _
      // Predicated region
      $region17: #{tpu_custom_call.1} parent=11 // pred_check
        %p269 = pneg %p160
      $region18: #{tpu_custom_call.1} parent=11 // pred_check_branch
        %271 = sbr.rel (%p269) target = $region20
      $region19: #{tpu_custom_call.1} parent=11 // pred_region
        _
      $region20: #{tpu_custom_call.1} parent=11 // pred_fallthru
        _
      // Predicated region
      $region21: #{tpu_custom_call.1} parent=11 // pred_check
        %p272 = pneg %p181
      $region22: #{tpu_custom_call.1} parent=11 // pred_check_branch
        %274 = sbr.rel (%p272) target = $region24
      $region23: #{tpu_custom_call.1} parent=11 // pred_region
        _
      $region24: #{tpu_custom_call.1} parent=11 // pred_fallthru
        _
      // Predicated region
      $region25: #{tpu_custom_call.1} parent=11 // pred_check
        %p275 = pneg %p202
      $region26: #{tpu_custom_call.1} parent=11 // pred_check_branch
        %277 = sbr.rel (%p275) target = $region28
      $region27: #{tpu_custom_call.1} parent=11 // pred_region
        _
      $region28: #{tpu_custom_call.1} parent=11 // pred_fallthru
        _
      // Predicated region
      $region29: #{tpu_custom_call.1} parent=11 // pred_check
        %p278 = pneg %p223
      $region30: #{tpu_custom_call.1} parent=11 // pred_check_branch
        %280 = sbr.rel (%p278) target = $region32
      $region31: #{tpu_custom_call.1} parent=11 // pred_region
        _
      $region32: #{tpu_custom_call.1} parent=11 // pred_fallthru
        _
    $region12: #{tpu_custom_call.1} parent=5 // pred_fallthru
      _
    %p281 = scmp.lt.s32.totalorder %s15, 18
    // Predicated region
    $region33: #{tpu_custom_call.1} parent=5 // pred_check
      %p282 = pneg %p281
    $region34: #{tpu_custom_call.1} parent=5 // pred_check_branch
      %284 = sbr.rel (%p282) target = $region36
    $region35: #{tpu_custom_call.1} parent=5 // pred_region
      // Predicated region
      $region37: #{tpu_custom_call.1} parent=35 // pred_check
        %p285 = pneg %p77
      $region38: #{tpu_custom_call.1} parent=35 // pred_check_branch
        %287 = sbr.rel (%p285) target = $region40
      $region39: #{tpu_custom_call.1} parent=35 // pred_region
        %p288 = scmp.lt.s32.totalorder %s22, 1
        %s289 = scalar_select %p288, %s22, 1
        %p290 = scmp.lt.s32.totalorder %s23, 2
        %s291 = scalar_select %p290, %s23, 2
        %s292 = smul.addr %s289, 3
        %s293 = sadd.s32 %s291, %s292
        %s294 = smul.addr %s293, 8
        %s295 = scalar_lea.vmem %s1, %s294
      $region40: #{tpu_custom_call.1} parent=35 // pred_fallthru
        _
      // Predicated region
      $region41: #{tpu_custom_call.1} parent=35 // pred_check
        %p296 = pneg %p105
      $region42: #{tpu_custom_call.1} parent=35 // pred_check_branch
        %298 = sbr.rel (%p296) target = $region44
      $region43: #{tpu_custom_call.1} parent=35 // pred_region
        %p299 = scmp.lt.s32.totalorder %s22, 1
        %s300 = scalar_select %p299, %s22, 1
        %p301 = scmp.lt.s32.totalorder %s24, 2
        %s302 = scalar_select %p301, %s24, 2
        %s303 = smul.addr %s300, 3
        %s304 = sadd.s32 %s302, %s303
        %s305 = smul.addr %s304, 8
        %s306 = scalar_lea.vmem %s2, %s305
      $region44: #{tpu_custom_call.1} parent=35 // pred_fallthru
        _
      // Predicated region
      $region45: #{tpu_custom_call.1} parent=35 // pred_check
        %p307 = pneg %p133
      $region46: #{tpu_custom_call.1} parent=35 // pred_check_branch
        %309 = sbr.rel (%p307) target = $region48
      $region47: #{tpu_custom_call.1} parent=35 // pred_region
        %s310 = smul.u32 16, %s23
        %p311 = scmp.lt.s32.totalorder %s22, 1
        %s312 = scalar_select %p311, %s22, 1
        %p313 = scmp.lt.s32.totalorder %s310, 47
        %s314 = scalar_select %p313, %s310, 47
        %s315 = smul.addr %s312, 48
        %s316 = sadd.s32 %s314, %s315
        %s317 = smul.addr %s316, 8
        %s318 = scalar_lea.vmem %s3, %s317
        %s319 = smul.u32 16, %s23
      $region48: #{tpu_custom_call.1} parent=35 // pred_fallthru
        _
    $region36: #{tpu_custom_call.1} parent=5 // pred_fallthru
      _
    %p320 = scmp.le.s32.totalorder 1, %s15
    %p321 = scmp.lt.s32.totalorder %s15, 19
    %p322 = pnand %p320, %p321
    %p323 = pneg %p322
    // Predicated region
    $region49: #{tpu_custom_call.1} parent=5 // pred_check
      _
    $region50: #{tpu_custom_call.1} parent=5 // pred_check_branch
      %325 = sbr.rel (%p322) target = $region52
    $region51: #{tpu_custom_call.1} parent=5 // pred_region
      %s326 = ssub.s32 %s15, 1
      %p327 = pneg %p55
      %p328 = pneg %p52
      %p329 = scmp.lt.s32.totalorder %s25, 1
      %s330 = scalar_select %p329, %s25, 1
      %p331 = scmp.lt.s32.totalorder %s26, 2
      %s332 = scalar_select %p331, %s26, 2
      %s333 = smul.addr %s330, 3
      %s334 = sadd.s32 %s332, %s333
      %s335 = smul.addr %s334, 8
      %s336 = scalar_lea.vmem %s1, %s335
      %p337 = pneg %p83
      %p338 = pneg %p80
      %p339 = scmp.lt.s32.totalorder %s25, 1
      %s340 = scalar_select %p339, %s25, 1
      %p341 = scmp.lt.s32.totalorder %s27, 2
      %s342 = scalar_select %p341, %s27, 2
      %s343 = smul.addr %s340, 3
      %s344 = sadd.s32 %s342, %s343
      %s345 = smul.addr %s344, 8
      %s346 = scalar_lea.vmem %s2, %s345
      %p347 = pneg %p111
      %p348 = pneg %p108
      %s349 = smul.u32 16, %s26
      %p350 = scmp.lt.s32.totalorder %s25, 1
      %s351 = scalar_select %p350, %s25, 1
      %p352 = scmp.lt.s32.totalorder %s349, 47
      %s353 = scalar_select %p352, %s349, 47
      %s354 = smul.addr %s351, 48
      %s355 = sadd.s32 %s353, %s354
      %s356 = smul.addr %s355, 8
      %s357 = scalar_lea.vmem %s3, %s356
      %p358 = pneg %p139
      %p359 = pneg %p136
      %p360 = pneg %p160
      %p361 = pneg %p157
      %p362 = pneg %p181
      %p363 = pneg %p178
      %p364 = pneg %p202
      %p365 = pneg %p199
      %p366 = pneg %p223
      %p367 = pneg %p220
      %p368 = pneg %p251
      %p369 = pneg %p248
      %s370 = smul.u32 16, %s26
      %p371 = scmp.lt.s32.totalorder %s25, 1
      %s372 = scalar_select %p371, %s25, 1
      %p373 = scmp.lt.s32.totalorder %s370, 47
      %s374 = scalar_select %p373, %s370, 47
      %s375 = smul.addr %s372, 48
      %s376 = sadd.s32 %s374, %s375
      %s377 = smul.addr %s376, 8
      %s378 = scalar_lea.vmem %s8, %s377
      %p379 = scmp.lt.s32.totalorder %s25, 1
      %s380 = scalar_select %p379, %s25, 1
      %p381 = scmp.lt.s32.totalorder %s26, 2
      %s382 = scalar_select %p381, %s26, 2
      %s383 = smul.addr %s380, 3
      %s384 = sadd.s32 %s382, %s383
      %s385 = smul.addr %s384, 8
      %s386 = scalar_lea.vmem %s1, %s385
      %p387 = scmp.lt.s32.totalorder %s25, 1
      %s388 = scalar_select %p387, %s25, 1
      %p389 = scmp.lt.s32.totalorder %s27, 2
      %s390 = scalar_select %p389, %s27, 2
      %s391 = smul.addr %s388, 3
      %s392 = sadd.s32 %s390, %s391
      %s393 = smul.addr %s392, 8
      %s394 = scalar_lea.vmem %s2, %s393
      %s395 = smul.u32 16, %s26
      %p396 = scmp.lt.s32.totalorder %s25, 1
      %s397 = scalar_select %p396, %s25, 1
      %p398 = scmp.lt.s32.totalorder %s395, 47
      %s399 = scalar_select %p398, %s395, 47
      %s400 = smul.addr %s397, 48
      %s401 = sadd.s32 %s399, %s400
      %s402 = smul.addr %s401, 8
      %s403 = scalar_lea.vmem %s3, %s402
      %s404 = smul.u32 16, %s26
      %s405 = smul.u32 16, %s26
      %p406 = scmp.lt.s32.totalorder %s25, 1
      %s407 = scalar_select %p406, %s25, 1
      %p408 = scmp.lt.s32.totalorder %s405, 47
      %s409 = scalar_select %p408, %s405, 47
      %s410 = smul.addr %s407, 48
      %s411 = sadd.s32 %s409, %s410
      %s412 = smul.addr %s411, 8
      %s413 = scalar_lea.vmem %s8, %s412
      %s414 = smul.u32 16, %s26
      %p415 = scmp.eq.s32.totalorder %s27, 0
      // Predicated region
      $region53: #{tpu_custom_call.1} parent=51 // pred_check
        %p416 = pneg %p415
      $region54: #{tpu_custom_call.1} parent=51 // pred_check_branch
        %418 = sbr.rel (%p416) target = $region56
      $region55: #{tpu_custom_call.1} parent=51 // pred_region
        %v419 = vld [vmem:[%s386] sm:$0xff]
        %420 = vxpose.xlu0.b32.start [1/16] %v419, 128
        %421 = vxpose.xlu0.b32.cont [2/16] 0.0, 128
        %422 = vxpose.xlu0.b32.cont [3/16] 0.0, 128
        %423 = vxpose.xlu0.b32.cont [4/16] 0.0, 128
        %424 = vxpose.xlu0.b32.cont [5/16] 0.0, 128
        %425 = vxpose.xlu0.b32.cont [6/16] 0.0, 128
        %426 = vxpose.xlu0.b32.cont [7/16] 0.0, 128
        %427 = vxpose.xlu0.b32.cont [8/16] 0.0, 128
        %428 = vxpose.xlu0.b32.cont [9/16] 0.0, 128
        %429 = vxpose.xlu0.b32.cont [10/16] 0.0, 128
        %430 = vxpose.xlu0.b32.cont [11/16] 0.0, 128
        %431 = vxpose.xlu0.b32.cont [12/16] 0.0, 128
        %432 = vxpose.xlu0.b32.cont [13/16] 0.0, 128
        %433 = vxpose.xlu0.b32.cont [14/16] 0.0, 128
        %434 = vxpose.xlu0.b32.cont [15/16] 0.0, 128
        %435 = vxpose.xlu0.b32.end [16/16] 0.0, 128
        %v436 = vpop.trf.xlu0
        %v437 = vpop.trf.xlu0
        %v438 = vpop.trf.xlu0
        %v439 = vpop.trf.xlu0
        %v440 = vpop.trf.xlu0
        %v441 = vpop.trf.xlu0
        %v442 = vpop.trf.xlu0
        %v443 = vpop.trf.xlu0
        %v444 = vpop.trf.xlu0
        %v445 = vpop.trf.xlu0
        %v446 = vpop.trf.xlu0
        %v447 = vpop.trf.xlu0
        %v448 = vpop.trf.xlu0
        %v449 = vpop.trf.xlu0
        %v450 = vpop.trf.xlu0
        %v451 = vpop.trf.xlu0
        %v452 = vld [vmem:[%s4] sm:$0xff]
        %v453 = vld [vmem:[%s5] sm:$0x1]
        %v455 = vlaneseq
        %v456 = vshrl.u32 %v455, 7
        %v457 = vsub.s32 0, %v456
        %v458 = vrot.slane %v453, %v457
        %vm460 = vcmask 64512
        %v462 = vsel %vm460, %v436, 0
        %v465 = vsel %vm460, %v437, 0
        %v468 = vsel %vm460, %v438, 0
        %v471 = vsel %vm460, %v439, 0
        %v474 = vsel %vm460, %v440, 0
        %v477 = vsel %vm460, %v441, 0
        %v480 = vsel %vm460, %v442, 0
        %v483 = vsel %vm460, %v443, 0
        %v486 = vsel %vm460, %v444, 0
        %v489 = vsel %vm460, %v445, 0
        %v492 = vsel %vm460, %v446, 0
        %v495 = vsel %vm460, %v447, 0
        %v498 = vsel %vm460, %v448, 0
        %v501 = vsel %vm460, %v449, 0
        %v504 = vsel %vm460, %v450, 0
        %v507 = vsel %vm460, %v451, 0
        %509 = vmatprep.subr.mxu0 0.0
        %510 = vmatpush1.msra.mxu0 0.0
        %511 = vmatprep.subr.mxu0 0.0
        %512 = vmatpush1.msra.mxu0 0.0
        %513 = vmatprep.subr.mxu0 0.0
        %514 = vmatpush1.msra.mxu0 0.0
        %515 = vmatprep.subr.mxu0 0.0
        %516 = vmatpush1.msra.mxu0 0.0
        %517 = vmatprep.subr.mxu0 0.0
        %518 = vmatpush1.msra.mxu0 0.0
        %519 = vmatprep.subr.mxu0 0.0
        %520 = vmatpush1.msra.mxu0 0.0
        %521 = vmatprep.subr.mxu0 0.0
        %522 = vmatpush1.msra.mxu0 0.0
        %523 = vmatprep.subr.mxu0 0.0
        %524 = vmatpush1.msra.mxu0 0.0
        %525 = vmatprep.subr.mxu0 0.0
        %526 = vmatpush1.msra.mxu0 0.0
        %527 = vmatprep.subr.mxu0 0.0
        %528 = vmatpush1.msra.mxu0 0.0
        %529 = vmatprep.subr.mxu0 0.0
        %530 = vmatpush1.msra.mxu0 0.0
        %531 = vmatprep.subr.mxu0 0.0
        %532 = vmatpush1.msra.mxu0 0.0
        %533 = vmatprep.subr.mxu0 0.0
        %534 = vmatpush1.msra.mxu0 0.0
        %535 = vmatprep.subr.mxu0 0.0
        %536 = vmatpush1.msra.mxu0 0.0
        %537 = vmatprep.subr.mxu0 0.0
        %538 = vmatpush1.msra.mxu0 0.0
        %539 = vmatprep.subr.mxu0 0.0
        %540 = vmatpush1.msra.mxu0 %v452
        %541 = vmatprep.subr.mxu0 0.0
        %542 = vmatpush2.msra.mxu0 0.0
        %543 = vmatprep.subr.mxu0 0.0
        %544 = vmatpush2.msra.mxu0 0.0
        %545 = vmatprep.subr.mxu0 0.0
        %546 = vmatpush2.msra.mxu0 0.0
        %547 = vmatprep.subr.mxu0 0.0
        %548 = vmatpush2.msra.mxu0 0.0
        %549 = vmatprep.subr.mxu0 0.0
        %550 = vmatpush2.msra.mxu0 0.0
        %551 = vmatprep.subr.mxu0 0.0
        %552 = vmatpush2.msra.mxu0 0.0
        %553 = vmatprep.subr.mxu0 0.0
        %554 = vmatpush2.msra.mxu0 0.0
        %555 = vmatprep.subr.mxu0 0.0
        %556 = vmatpush2.msra.mxu0 0.0
        %557 = vmatprep.subr.mxu0 0.0
        %558 = vmatpush2.msra.mxu0 0.0
        %559 = vmatprep.subr.mxu0 0.0
        %560 = vmatpush2.msra.mxu0 0.0
        %561 = vmatprep.subr.mxu0 0.0
        %562 = vmatpush2.msra.mxu0 0.0
        %563 = vmatprep.subr.mxu0 0.0
        %564 = vmatpush2.msra.mxu0 0.0
        %565 = vmatprep.subr.mxu0 0.0
        %566 = vmatpush2.msra.mxu0 0.0
        %567 = vmatprep.subr.mxu0 0.0
        %568 = vmatpush2.msra.mxu0 0.0
        %569 = vmatprep.subr.mxu0 0.0
        %570 = vmatpush2.msra.mxu0 0.0
        %571 = vmatprep.subr.mxu0 0.0
        %572 = vmatpush2.msra.mxu0 0.0
        %573 = vmatprep.mubr.f32.mxu0 0.0
        %574 = vmatmul.mubr.f32.gmra.mxu0 %v462
        %v575 = vpop.f32.mrf.mxu0
        %v576 = vadd.f32 %v458, %v575
        %v577 = vpop.f32.mrf.mxu0
        %578 = vmatprep.mubr.f32.mxu0 0.0
        %579 = vmatmul.mubr.f32.gmra.mxu0 %v465
        %v580 = vpop.f32.mrf.mxu0
        %v581 = vadd.f32 %v458, %v580
        %v582 = vpop.f32.mrf.mxu0
        %583 = vmatprep.mubr.f32.mxu0 0.0
        %584 = vmatmul.mubr.f32.gmra.mxu0 %v468
        %v585 = vpop.f32.mrf.mxu0
        %v586 = vadd.f32 %v458, %v585
        %v587 = vpop.f32.mrf.mxu0
        %588 = vmatprep.mubr.f32.mxu0 0.0
        %589 = vmatmul.mubr.f32.gmra.mxu0 %v471
        %v590 = vpop.f32.mrf.mxu0
        %v591 = vadd.f32 %v458, %v590
        %v592 = vpop.f32.mrf.mxu0
        %593 = vmatprep.mubr.f32.mxu0 0.0
        %594 = vmatmul.mubr.f32.gmra.mxu0 %v474
        %v595 = vpop.f32.mrf.mxu0
        %v596 = vadd.f32 %v458, %v595
        %v597 = vpop.f32.mrf.mxu0
        %598 = vmatprep.mubr.f32.mxu0 0.0
        %599 = vmatmul.mubr.f32.gmra.mxu0 %v477
        %v600 = vpop.f32.mrf.mxu0
        %v601 = vadd.f32 %v458, %v600
        %v602 = vpop.f32.mrf.mxu0
        %603 = vmatprep.mubr.f32.mxu0 0.0
        %604 = vmatmul.mubr.f32.gmra.mxu0 %v480
        %v605 = vpop.f32.mrf.mxu0
        %v606 = vadd.f32 %v458, %v605
        %v607 = vpop.f32.mrf.mxu0
        %608 = vmatprep.mubr.f32.mxu0 0.0
        %609 = vmatmul.mubr.f32.gmra.mxu0 %v483
        %v610 = vpop.f32.mrf.mxu0
        %v611 = vadd.f32 %v458, %v610
        %v612 = vpop.f32.mrf.mxu0
        %613 = vmatprep.mubr.f32.mxu0 0.0
        %614 = vmatmul.mubr.f32.gmra.mxu0 %v486
        %v615 = vpop.f32.mrf.mxu0
        %v616 = vadd.f32 %v458, %v615
        %v617 = vpop.f32.mrf.mxu0
        %618 = vmatprep.mubr.f32.mxu0 0.0
        %619 = vmatmul.mubr.f32.gmra.mxu0 %v489
        %v620 = vpop.f32.mrf.mxu0
        %v621 = vadd.f32 %v458, %v620
        %v622 = vpop.f32.mrf.mxu0
        %623 = vmatprep.mubr.f32.mxu0 0.0
        %624 = vmatmul.mubr.f32.gmra.mxu0 %v492
        %v625 = vpop.f32.mrf.mxu0
        %v626 = vadd.f32 %v458, %v625
        %v627 = vpop.f32.mrf.mxu0
        %628 = vmatprep.mubr.f32.mxu0 0.0
        %629 = vmatmul.mubr.f32.gmra.mxu0 %v495
        %v630 = vpop.f32.mrf.mxu0
        %v631 = vadd.f32 %v458, %v630
        %v632 = vpop.f32.mrf.mxu0
        %633 = vmatprep.mubr.f32.mxu0 0.0
        %634 = vmatmul.mubr.f32.gmra.mxu0 %v498
        %v635 = vpop.f32.mrf.mxu0
        %v636 = vadd.f32 %v458, %v635
        %v637 = vpop.f32.mrf.mxu0
        %638 = vmatprep.mubr.f32.mxu0 0.0
        %639 = vmatmul.mubr.f32.gmra.mxu0 %v501
        %v640 = vpop.f32.mrf.mxu0
        %v641 = vadd.f32 %v458, %v640
        %v642 = vpop.f32.mrf.mxu0
        %643 = vmatprep.mubr.f32.mxu0 0.0
        %644 = vmatmul.mubr.f32.gmra.mxu0 %v504
        %v645 = vpop.f32.mrf.mxu0
        %v646 = vadd.f32 %v458, %v645
        %v647 = vpop.f32.mrf.mxu0
        %648 = vmatprep.mubr.f32.mxu0 0.0
        %649 = vmatmul.mubr.f32.gmra.mxu0 %v507
        %v650 = vpop.f32.mrf.mxu0
        %v651 = vadd.f32 %v458, %v650
        %v652 = vpop.f32.mrf.mxu0
        %653 = vdwg.mxu0
        %vm654 = vcmask 31744
        %655 = vst.msk [vmem:[#allocation2] sm:$0xff] %vm654, %v576
        %656 = vst.msk [vmem:[#allocation2 + $0x8] sm:$0xff] %vm654, %v581
        %657 = vst.msk [vmem:[#allocation2 + $0x10] sm:$0xff] %vm654, %v586
        %658 = vst.msk [vmem:[#allocation2 + $0x18] sm:$0xff] %vm654, %v591
        %659 = vst.msk [vmem:[#allocation2 + $0x20] sm:$0xff] %vm654, %v596
        %660 = vst.msk [vmem:[#allocation2 + $0x28] sm:$0xff] %vm654, %v601
        %661 = vst.msk [vmem:[#allocation2 + $0x30] sm:$0xff] %vm654, %v606
        %662 = vst.msk [vmem:[#allocation2 + $0x38] sm:$0xff] %vm654, %v611
        %663 = vst.msk [vmem:[#allocation2 + $0x40] sm:$0xff] %vm654, %v616
        %664 = vst.msk [vmem:[#allocation2 + $0x48] sm:$0xff] %vm654, %v621
        %665 = vst.msk [vmem:[#allocation2 + $0x50] sm:$0xff] %vm654, %v626
        %666 = vst.msk [vmem:[#allocation2 + $0x58] sm:$0xff] %vm654, %v631
        %667 = vst.msk [vmem:[#allocation2 + $0x60] sm:$0xff] %vm654, %v636
        %668 = vst.msk [vmem:[#allocation2 + $0x68] sm:$0xff] %vm654, %v641
        %669 = vst.msk [vmem:[#allocation2 + $0x70] sm:$0xff] %vm654, %v646
        %670 = vst.msk [vmem:[#allocation2 + $0x78] sm:$0xff] %vm654, %v651
        %vm671 = vcmask 7168
        %672 = vst.msk [vmem:[#allocation3] sm:$0xff] %vm671, -inf
        %673 = vst.msk [vmem:[#allocation3 + $0x8] sm:$0xff] %vm671, -inf
        %674 = vst.msk [vmem:[#allocation3 + $0x10] sm:$0xff] %vm671, -inf
        %675 = vst.msk [vmem:[#allocation3 + $0x18] sm:$0xff] %vm671, -inf
        %676 = vst.msk [vmem:[#allocation3 + $0x20] sm:$0xff] %vm671, -inf
        %677 = vst.msk [vmem:[#allocation3 + $0x28] sm:$0xff] %vm671, -inf
        %678 = vst.msk [vmem:[#allocation3 + $0x30] sm:$0xff] %vm671, -inf
        %679 = vst.msk [vmem:[#allocation3 + $0x38] sm:$0xff] %vm671, -inf
        %680 = vst.msk [vmem:[#allocation3 + $0x40] sm:$0xff] %vm671, -inf
        %681 = vst.msk [vmem:[#allocation3 + $0x48] sm:$0xff] %vm671, -inf
        %682 = vst.msk [vmem:[#allocation3 + $0x50] sm:$0xff] %vm671, -inf
        %683 = vst.msk [vmem:[#allocation3 + $0x58] sm:$0xff] %vm671, -inf
        %684 = vst.msk [vmem:[#allocation3 + $0x60] sm:$0xff] %vm671, -inf
        %685 = vst.msk [vmem:[#allocation3 + $0x68] sm:$0xff] %vm671, -inf
        %686 = vst.msk [vmem:[#allocation3 + $0x70] sm:$0xff] %vm671, -inf
        %687 = vst.msk [vmem:[#allocation3 + $0x78] sm:$0xff] %vm671, -inf
        %688 = vst.msk [vmem:[#allocation4] sm:$0xff] %vm671, 0.0
        %689 = vst.msk [vmem:[#allocation4 + $0x8] sm:$0xff] %vm671, 0.0
        %690 = vst.msk [vmem:[#allocation4 + $0x10] sm:$0xff] %vm671, 0.0
        %691 = vst.msk [vmem:[#allocation4 + $0x18] sm:$0xff] %vm671, 0.0
        %692 = vst.msk [vmem:[#allocation4 + $0x20] sm:$0xff] %vm671, 0.0
        %693 = vst.msk [vmem:[#allocation4 + $0x28] sm:$0xff] %vm671, 0.0
        %694 = vst.msk [vmem:[#allocation4 + $0x30] sm:$0xff] %vm671, 0.0
        %695 = vst.msk [vmem:[#allocation4 + $0x38] sm:$0xff] %vm671, 0.0
        %696 = vst.msk [vmem:[#allocation4 + $0x40] sm:$0xff] %vm671, 0.0
        %697 = vst.msk [vmem:[#allocation4 + $0x48] sm:$0xff] %vm671, 0.0
        %698 = vst.msk [vmem:[#allocation4 + $0x50] sm:$0xff] %vm671, 0.0
        %699 = vst.msk [vmem:[#allocation4 + $0x58] sm:$0xff] %vm671, 0.0
        %700 = vst.msk [vmem:[#allocation4 + $0x60] sm:$0xff] %vm671, 0.0
        %701 = vst.msk [vmem:[#allocation4 + $0x68] sm:$0xff] %vm671, 0.0
        %702 = vst.msk [vmem:[#allocation4 + $0x70] sm:$0xff] %vm671, 0.0
        %703 = vst.msk [vmem:[#allocation4 + $0x78] sm:$0xff] %vm671, 0.0
        %704 = vst.msk [vmem:[#allocation5] sm:$0xff] %vm460, 0.0
        %705 = vst.msk [vmem:[#allocation5 + $0x8] sm:$0xff] %vm460, 0.0
        %706 = vst.msk [vmem:[#allocation5 + $0x10] sm:$0xff] %vm460, 0.0
        %707 = vst.msk [vmem:[#allocation5 + $0x18] sm:$0xff] %vm460, 0.0
        %708 = vst.msk [vmem:[#allocation5 + $0x20] sm:$0xff] %vm460, 0.0
        %709 = vst.msk [vmem:[#allocation5 + $0x28] sm:$0xff] %vm460, 0.0
        %710 = vst.msk [vmem:[#allocation5 + $0x30] sm:$0xff] %vm460, 0.0
        %711 = vst.msk [vmem:[#allocation5 + $0x38] sm:$0xff] %vm460, 0.0
        %712 = vst.msk [vmem:[#allocation5 + $0x40] sm:$0xff] %vm460, 0.0
        %713 = vst.msk [vmem:[#allocation5 + $0x48] sm:$0xff] %vm460, 0.0
        %714 = vst.msk [vmem:[#allocation5 + $0x50] sm:$0xff] %vm460, 0.0
        %715 = vst.msk [vmem:[#allocation5 + $0x58] sm:$0xff] %vm460, 0.0
        %716 = vst.msk [vmem:[#allocation5 + $0x60] sm:$0xff] %vm460, 0.0
        %717 = vst.msk [vmem:[#allocation5 + $0x68] sm:$0xff] %vm460, 0.0
        %718 = vst.msk [vmem:[#allocation5 + $0x70] sm:$0xff] %vm460, 0.0
        %719 = vst.msk [vmem:[#allocation5 + $0x78] sm:$0xff] %vm460, 0.0
      $region56: #{tpu_custom_call.1} parent=51 // pred_fallthru
        _
      %v720 = vld [vmem:[%s6] sm:$0xff]
      %v721 = vld [vmem:[%s6 + $0x8] sm:$0xf]
      %v722 = vld [vmem:[%s394] sm:$0xff]
      %v723 = vld [vmem:[%s7] sm:$0xff]
      %v724 = vld [vmem:[%s7 + $0x8] sm:$0xf]
      %726 = vset.pattern.permute.xlu0 0
      %727 = vperm.xlu0 %726, %v723
      %v728 = vpop.permute.xlu0 %727
      %731 = vset.pattern.permute.xlu0 0
      %732 = vperm.xlu0 %731, %v724
      %v733 = vpop.permute.xlu0 %732
      %vm735 = vcmask 64512
      %v737 = vsel %vm735, %v720, 0
      %v740 = vsel %vm735, %v721, 0
      %742 = vmatprep.subr.mxu0 0.0
      %743 = vmatpush1.msra.mxu0 0.0
      %744 = vmatprep.subr.mxu0 0.0
      %745 = vmatpush1.msra.mxu0 0.0
      %746 = vmatprep.subr.mxu0 0.0
      %747 = vmatpush1.msra.mxu0 0.0
      %748 = vmatprep.subr.mxu0 0.0
      %749 = vmatpush1.msra.mxu0 0.0
      %750 = vmatprep.subr.mxu0 0.0
      %751 = vmatpush1.msra.mxu0 0.0
      %752 = vmatprep.subr.mxu0 0.0
      %753 = vmatpush1.msra.mxu0 0.0
      %754 = vmatprep.subr.mxu0 0.0
      %755 = vmatpush1.msra.mxu0 0.0
      %756 = vmatprep.subr.mxu0 0.0
      %757 = vmatpush1.msra.mxu0 0.0
      %758 = vmatprep.subr.mxu0 0.0
      %759 = vmatpush1.msra.mxu0 0.0
      %760 = vmatprep.subr.mxu0 0.0
      %761 = vmatpush1.msra.mxu0 0.0
      %762 = vmatprep.subr.mxu0 0.0
      %763 = vmatpush1.msra.mxu0 0.0
      %764 = vmatprep.subr.mxu0 0.0
      %765 = vmatpush1.msra.mxu0 0.0
      %766 = vmatprep.subr.mxu0 0.0
      %767 = vmatpush1.msra.mxu0 0.0
      %768 = vmatprep.subr.mxu0 0.0
      %769 = vmatpush1.msra.mxu0 0.0
      %770 = vmatprep.subr.mxu0 0.0
      %771 = vmatpush1.msra.mxu0 0.0
      %772 = vmatprep.subr.mxu0 0.0
      %773 = vmatpush1.msra.mxu0 %v722
      %774 = vmatprep.subr.mxu0 0.0
      %775 = vmatpush2.msra.mxu0 0.0
      %776 = vmatprep.subr.mxu0 0.0
      %777 = vmatpush2.msra.mxu0 0.0
      %778 = vmatprep.subr.mxu0 0.0
      %779 = vmatpush2.msra.mxu0 0.0
      %780 = vmatprep.subr.mxu0 0.0
      %781 = vmatpush2.msra.mxu0 0.0
      %782 = vmatprep.subr.mxu0 0.0
      %783 = vmatpush2.msra.mxu0 0.0
      %784 = vmatprep.subr.mxu0 0.0
      %785 = vmatpush2.msra.mxu0 0.0
      %786 = vmatprep.subr.mxu0 0.0
      %787 = vmatpush2.msra.mxu0 0.0
      %788 = vmatprep.subr.mxu0 0.0
      %789 = vmatpush2.msra.mxu0 0.0
      %790 = vmatprep.subr.mxu0 0.0
      %791 = vmatpush2.msra.mxu0 0.0
      %792 = vmatprep.subr.mxu0 0.0
      %793 = vmatpush2.msra.mxu0 0.0
      %794 = vmatprep.subr.mxu0 0.0
      %795 = vmatpush2.msra.mxu0 0.0
      %796 = vmatprep.subr.mxu0 0.0
      %797 = vmatpush2.msra.mxu0 0.0
      %798 = vmatprep.subr.mxu0 0.0
      %799 = vmatpush2.msra.mxu0 0.0
      %800 = vmatprep.subr.mxu0 0.0
      %801 = vmatpush2.msra.mxu0 0.0
      %802 = vmatprep.subr.mxu0 0.0
      %803 = vmatpush2.msra.mxu0 0.0
      %804 = vmatprep.subr.mxu0 0.0
      %805 = vmatpush2.msra.mxu0 0.0
      %806 = vmatprep.mubr.f32.mxu0 0.0
      %807 = vmatmul.mubr.f32.gmra.mxu0 %v737
      %v808 = vpop.f32.mrf.mxu0
      %v809 = vadd.f32 %v728, %v808
      %v810 = vpop.f32.mrf.mxu0
      %811 = vmatprep.mubr.f32.mxu0 0.0
      %812 = vmatmul.mubr.f32.gmra.mxu0 %v740
      %v813 = vpop.f32.mrf.mxu0
      %v814 = vadd.f32 %v733, %v813
      %v815 = vpop.f32.mrf.mxu0
      %816 = vdwg.mxu0
      %v817 = vld [vmem:[#allocation2] sm:$0xff]
      %v818 = vld [vmem:[#allocation2 + $0x8] sm:$0xff]
      %v819 = vld [vmem:[#allocation2 + $0x10] sm:$0xff]
      %v820 = vld [vmem:[#allocation2 + $0x18] sm:$0xff]
      %v821 = vld [vmem:[#allocation2 + $0x20] sm:$0xff]
      %v822 = vld [vmem:[#allocation2 + $0x28] sm:$0xff]
      %v823 = vld [vmem:[#allocation2 + $0x30] sm:$0xff]
      %v824 = vld [vmem:[#allocation2 + $0x38] sm:$0xff]
      %v825 = vld [vmem:[#allocation2 + $0x40] sm:$0xff]
      %v826 = vld [vmem:[#allocation2 + $0x48] sm:$0xff]
      %v827 = vld [vmem:[#allocation2 + $0x50] sm:$0xff]
      %v828 = vld [vmem:[#allocation2 + $0x58] sm:$0xff]
      %v829 = vld [vmem:[#allocation2 + $0x60] sm:$0xff]
      %v830 = vld [vmem:[#allocation2 + $0x68] sm:$0xff]
      %v831 = vld [vmem:[#allocation2 + $0x70] sm:$0xff]
      %v832 = vld [vmem:[#allocation2 + $0x78] sm:$0xff]
      %vm833 = vcmask 31744
      %v835 = vsel %vm833, %v817, 0
      %v838 = vsel %vm833, %v818, 0
      %v841 = vsel %vm833, %v819, 0
      %v844 = vsel %vm833, %v820, 0
      %v847 = vsel %vm833, %v821, 0
      %v850 = vsel %vm833, %v822, 0
      %v853 = vsel %vm833, %v823, 0
      %v856 = vsel %vm833, %v824, 0
      %v859 = vsel %vm833, %v825, 0
      %v862 = vsel %vm833, %v826, 0
      %v865 = vsel %vm833, %v827, 0
      %v868 = vsel %vm833, %v828, 0
      %v871 = vsel %vm833, %v829, 0
      %v874 = vsel %vm833, %v830, 0
      %v877 = vsel %vm833, %v831, 0
      %v880 = vsel %vm833, %v832, 0
      %vm882 = vcmask 1043456
      %v884 = vsel %vm882, %v814, 0
      %886 = vmatprep.subr.mxu0 0.0
      %887 = vmatpush1.msra.mxu0 0.0
      %888 = vmatprep.subr.mxu0 0.0
      %889 = vmatpush1.msra.mxu0 0.0
      %890 = vmatprep.subr.mxu0 0.0
      %891 = vmatpush1.msra.mxu0 0.0
      %892 = vmatprep.subr.mxu0 0.0
      %893 = vmatpush1.msra.mxu0 0.0
      %894 = vmatprep.subr.mxu0 0.0
      %895 = vmatpush1.msra.mxu0 0.0
      %896 = vmatprep.subr.mxu0 0.0
      %897 = vmatpush1.msra.mxu0 0.0
      %898 = vmatprep.subr.mxu0 0.0
      %899 = vmatpush1.msra.mxu0 0.0
      %900 = vmatprep.subr.mxu0 0.0
      %901 = vmatpush1.msra.mxu0 0.0
      %902 = vmatprep.subr.mxu0 0.0
      %903 = vmatpush1.msra.mxu0 0.0
      %904 = vmatprep.subr.mxu0 0.0
      %905 = vmatpush1.msra.mxu0 0.0
      %906 = vmatprep.subr.mxu0 0.0
      %907 = vmatpush1.msra.mxu0 0.0
      %908 = vmatprep.subr.mxu0 0.0
      %909 = vmatpush1.msra.mxu0 0.0
      %910 = vmatprep.subr.mxu0 0.0
      %911 = vmatpush1.msra.mxu0 0.0
      %912 = vmatprep.subr.mxu0 0.0
      %913 = vmatpush1.msra.mxu0 0.0
      %914 = vmatprep.subr.mxu0 0.0
      %915 = vmatpush1.msra.mxu0 0.0
      %916 = vmatprep.subr.mxu0 0.0
      %917 = vmatpush1.msra.mxu0 %v884
      %918 = vmatprep.subr.mxu0 0.0
      %919 = vmatpush2.msra.mxu0 0.0
      %920 = vmatprep.subr.mxu0 0.0
      %921 = vmatpush2.msra.mxu0 0.0
      %922 = vmatprep.subr.mxu0 0.0
      %923 = vmatpush2.msra.mxu0 0.0
      %924 = vmatprep.subr.mxu0 0.0
      %925 = vmatpush2.msra.mxu0 0.0
      %926 = vmatprep.subr.mxu0 0.0
      %927 = vmatpush2.msra.mxu0 0.0
      %928 = vmatprep.subr.mxu0 0.0
      %929 = vmatpush2.msra.mxu0 0.0
      %930 = vmatprep.subr.mxu0 0.0
      %931 = vmatpush2.msra.mxu0 0.0
      %932 = vmatprep.subr.mxu0 0.0
      %933 = vmatpush2.msra.mxu0 0.0
      %934 = vmatprep.subr.mxu0 0.0
      %935 = vmatpush2.msra.mxu0 0.0
      %936 = vmatprep.subr.mxu0 0.0
      %937 = vmatpush2.msra.mxu0 0.0
      %938 = vmatprep.subr.mxu0 0.0
      %939 = vmatpush2.msra.mxu0 0.0
      %940 = vmatprep.subr.mxu0 0.0
      %941 = vmatpush2.msra.mxu0 0.0
      %942 = vmatprep.subr.mxu0 0.0
      %943 = vmatpush2.msra.mxu0 0.0
      %944 = vmatprep.subr.mxu0 0.0
      %945 = vmatpush2.msra.mxu0 0.0
      %946 = vmatprep.subr.mxu0 0.0
      %947 = vmatpush2.msra.mxu0 0.0
      %948 = vmatprep.subr.mxu0 0.0
      %949 = vmatpush2.msra.mxu0 0.0
      %950 = vmatprep.mubr.f32.mxu0 0.0
      %951 = vmatmul.mubr.f32.gmra.mxu0 %v835
      %v952 = vpop.f32.mrf.mxu0
      %v953 = vadd.f32 0.0, %v952
      %v954 = vpop.f32.mrf.mxu0
      %955 = vmatprep.mubr.f32.mxu0 0.0
      %956 = vmatmul.mubr.f32.gmra.mxu0 %v838
      %v957 = vpop.f32.mrf.mxu0
      %v958 = vadd.f32 0.0, %v957
      %v959 = vpop.f32.mrf.mxu0
      %960 = vmatprep.mubr.f32.mxu0 0.0
      %961 = vmatmul.mubr.f32.gmra.mxu0 %v841
      %v962 = vpop.f32.mrf.mxu0
      %v963 = vadd.f32 0.0, %v962
      %v964 = vpop.f32.mrf.mxu0
      %965 = vmatprep.mubr.f32.mxu0 0.0
      %966 = vmatmul.mubr.f32.gmra.mxu0 %v844
      %v967 = vpop.f32.mrf.mxu0
      %v968 = vadd.f32 0.0, %v967
      %v969 = vpop.f32.mrf.mxu0
      %970 = vmatprep.mubr.f32.mxu0 0.0
      %971 = vmatmul.mubr.f32.gmra.mxu0 %v847
      %v972 = vpop.f32.mrf.mxu0
      %v973 = vadd.f32 0.0, %v972
      %v974 = vpop.f32.mrf.mxu0
      %975 = vmatprep.mubr.f32.mxu0 0.0
      %976 = vmatmul.mubr.f32.gmra.mxu0 %v850
      %v977 = vpop.f32.mrf.mxu0
      %v978 = vadd.f32 0.0, %v977
      %v979 = vpop.f32.mrf.mxu0
      %980 = vmatprep.mubr.f32.mxu0 0.0
      %981 = vmatmul.mubr.f32.gmra.mxu0 %v853
      %v982 = vpop.f32.mrf.mxu0
      %v983 = vadd.f32 0.0, %v982
      %v984 = vpop.f32.mrf.mxu0
      %985 = vmatprep.mubr.f32.mxu0 0.0
      %986 = vmatmul.mubr.f32.gmra.mxu0 %v856
      %v987 = vpop.f32.mrf.mxu0
      %v988 = vadd.f32 0.0, %v987
      %v989 = vpop.f32.mrf.mxu0
      %990 = vmatprep.mubr.f32.mxu0 0.0
      %991 = vmatmul.mubr.f32.gmra.mxu0 %v859
      %v992 = vpop.f32.mrf.mxu0
      %v993 = vadd.f32 0.0, %v992
      %v994 = vpop.f32.mrf.mxu0
      %995 = vmatprep.mubr.f32.mxu0 0.0
      %996 = vmatmul.mubr.f32.gmra.mxu0 %v862
      %v997 = vpop.f32.mrf.mxu0
      %v998 = vadd.f32 0.0, %v997
      %v999 = vpop.f32.mrf.mxu0
      %1000 = vmatprep.mubr.f32.mxu0 0.0
      %1001 = vmatmul.mubr.f32.gmra.mxu0 %v865
      %v1002 = vpop.f32.mrf.mxu0
      %v1003 = vadd.f32 0.0, %v1002
      %v1004 = vpop.f32.mrf.mxu0
      %1005 = vmatprep.mubr.f32.mxu0 0.0
      %1006 = vmatmul.mubr.f32.gmra.mxu0 %v868
      %v1007 = vpop.f32.mrf.mxu0
      %v1008 = vadd.f32 0.0, %v1007
      %v1009 = vpop.f32.mrf.mxu0
      %1010 = vmatprep.mubr.f32.mxu0 0.0
      %1011 = vmatmul.mubr.f32.gmra.mxu0 %v871
      %v1012 = vpop.f32.mrf.mxu0
      %v1013 = vadd.f32 0.0, %v1012
      %v1014 = vpop.f32.mrf.mxu0
      %1015 = vmatprep.mubr.f32.mxu0 0.0
      %1016 = vmatmul.mubr.f32.gmra.mxu0 %v874
      %v1017 = vpop.f32.mrf.mxu0
      %v1018 = vadd.f32 0.0, %v1017
      %v1019 = vpop.f32.mrf.mxu0
      %1020 = vmatprep.mubr.f32.mxu0 0.0
      %1021 = vmatmul.mubr.f32.gmra.mxu0 %v877
      %v1022 = vpop.f32.mrf.mxu0
      %v1023 = vadd.f32 0.0, %v1022
      %v1024 = vpop.f32.mrf.mxu0
      %1025 = vmatprep.mubr.f32.mxu0 0.0
      %1026 = vmatmul.mubr.f32.gmra.mxu0 %v880
      %v1027 = vpop.f32.mrf.mxu0
      %v1028 = vadd.f32 0.0, %v1027
      %v1029 = vpop.f32.mrf.mxu0
      %1030 = vdwg.mxu0
      %v1031 = vld [vmem:[#allocation3] sm:$0xff]
      %v1032 = vld [vmem:[#allocation3 + $0x8] sm:$0xff]
      %v1033 = vld [vmem:[#allocation3 + $0x10] sm:$0xff]
      %v1034 = vld [vmem:[#allocation3 + $0x18] sm:$0xff]
      %v1035 = vld [vmem:[#allocation3 + $0x20] sm:$0xff]
      %v1036 = vld [vmem:[#allocation3 + $0x28] sm:$0xff]
      %v1037 = vld [vmem:[#allocation3 + $0x30] sm:$0xff]
      %v1038 = vld [vmem:[#allocation3 + $0x38] sm:$0xff]
      %v1039 = vld [vmem:[#allocation3 + $0x40] sm:$0xff]
      %v1040 = vld [vmem:[#allocation3 + $0x48] sm:$0xff]
      %v1041 = vld [vmem:[#allocation3 + $0x50] sm:$0xff]
      %v1042 = vld [vmem:[#allocation3 + $0x58] sm:$0xff]
      %v1043 = vld [vmem:[#allocation3 + $0x60] sm:$0xff]
      %v1044 = vld [vmem:[#allocation3 + $0x68] sm:$0xff]
      %v1045 = vld [vmem:[#allocation3 + $0x70] sm:$0xff]
      %v1046 = vld [vmem:[#allocation3 + $0x78] sm:$0xff]
      %1047 = vmax.xlane.f32.xlu0 %v953
      %v1048 = vpop.xlane.xlu0 %1047
      %1049 = vmax.xlane.f32.xlu0 %v958
      %v1050 = vpop.xlane.xlu0 %1049
      %1051 = vmax.xlane.f32.xlu0 %v963
      %v1052 = vpop.xlane.xlu0 %1051
      %1053 = vmax.xlane.f32.xlu0 %v968
      %v1054 = vpop.xlane.xlu0 %1053
      %1055 = vmax.xlane.f32.xlu0 %v973
      %v1056 = vpop.xlane.xlu0 %1055
      %1057 = vmax.xlane.f32.xlu0 %v978
      %v1058 = vpop.xlane.xlu0 %1057
      %1059 = vmax.xlane.f32.xlu0 %v983
      %v1060 = vpop.xlane.xlu0 %1059
      %1061 = vmax.xlane.f32.xlu0 %v988
      %v1062 = vpop.xlane.xlu0 %1061
      %1063 = vmax.xlane.f32.xlu0 %v993
      %v1064 = vpop.xlane.xlu0 %1063
      %1065 = vmax.xlane.f32.xlu0 %v998
      %v1066 = vpop.xlane.xlu0 %1065
      %1067 = vmax.xlane.f32.xlu0 %v1003
      %v1068 = vpop.xlane.xlu0 %1067
      %1069 = vmax.xlane.f32.xlu0 %v1008
      %v1070 = vpop.xlane.xlu0 %1069
      %1071 = vmax.xlane.f32.xlu0 %v1013
      %v1072 = vpop.xlane.xlu0 %1071
      %1073 = vmax.xlane.f32.xlu0 %v1018
      %v1074 = vpop.xlane.xlu0 %1073
      %1075 = vmax.xlane.f32.xlu0 %v1023
      %v1076 = vpop.xlane.xlu0 %1075
      %1077 = vmax.xlane.f32.xlu0 %v1028
      %v1078 = vpop.xlane.xlu0 %1077
      %v1079 = vmax.f32 %v1031, %v1048
      %v1080 = vmax.f32 %v1032, %v1050
      %v1081 = vmax.f32 %v1033, %v1052
      %v1082 = vmax.f32 %v1034, %v1054
      %v1083 = vmax.f32 %v1035, %v1056
      %v1084 = vmax.f32 %v1036, %v1058
      %v1085 = vmax.f32 %v1037, %v1060
      %v1086 = vmax.f32 %v1038, %v1062
      %v1087 = vmax.f32 %v1039, %v1064
      %v1088 = vmax.f32 %v1040, %v1066
      %v1089 = vmax.f32 %v1041, %v1068
      %v1090 = vmax.f32 %v1042, %v1070
      %v1091 = vmax.f32 %v1043, %v1072
      %v1092 = vmax.f32 %v1044, %v1074
      %v1093 = vmax.f32 %v1045, %v1076
      %v1094 = vmax.f32 %v1046, %v1078
      %v1095 = vsub.f32 %v1031, %v1079
      %v1096 = vsub.f32 %v1032, %v1080
      %v1097 = vsub.f32 %v1033, %v1081
      %v1098 = vsub.f32 %v1034, %v1082
      %v1099 = vsub.f32 %v1035, %v1083
      %v1100 = vsub.f32 %v1036, %v1084
      %v1101 = vsub.f32 %v1037, %v1085
      %v1102 = vsub.f32 %v1038, %v1086
      %v1103 = vsub.f32 %v1039, %v1087
      %v1104 = vsub.f32 %v1040, %v1088
      %v1105 = vsub.f32 %v1041, %v1089
      %v1106 = vsub.f32 %v1042, %v1090
      %v1107 = vsub.f32 %v1043, %v1091
      %v1108 = vsub.f32 %v1044, %v1092
      %v1109 = vsub.f32 %v1045, %v1093
      %v1110 = vsub.f32 %v1046, %v1094
      %v1111 = vmul.f32 %v1095, 1.442695
      %v1112 = vpow.pop %v1111
      %v1113 = vmul.f32 %v1096, 1.442695
      %v1114 = vpow.pop %v1113
      %v1115 = vmul.f32 %v1097, 1.442695
      %v1116 = vpow.pop %v1115
      %v1117 = vmul.f32 %v1098, 1.442695
      %v1118 = vpow.pop %v1117
      %v1119 = vmul.f32 %v1099, 1.442695
      %v1120 = vpow.pop %v1119
      %v1121 = vmul.f32 %v1100, 1.442695
      %v1122 = vpow.pop %v1121
      %v1123 = vmul.f32 %v1101, 1.442695
      %v1124 = vpow.pop %v1123
      %v1125 = vmul.f32 %v1102, 1.442695
      %v1126 = vpow.pop %v1125
      %v1127 = vmul.f32 %v1103, 1.442695
      %v1128 = vpow.pop %v1127
      %v1129 = vmul.f32 %v1104, 1.442695
      %v1130 = vpow.pop %v1129
      %v1131 = vmul.f32 %v1105, 1.442695
      %v1132 = vpow.pop %v1131
      %v1133 = vmul.f32 %v1106, 1.442695
      %v1134 = vpow.pop %v1133
      %v1135 = vmul.f32 %v1107, 1.442695
      %v1136 = vpow.pop %v1135
      %v1137 = vmul.f32 %v1108, 1.442695
      %v1138 = vpow.pop %v1137
      %v1139 = vmul.f32 %v1109, 1.442695
      %v1140 = vpow.pop %v1139
      %v1141 = vmul.f32 %v1110, 1.442695
      %v1142 = vpow.pop %v1141
      %1144 = vset.pattern.permute.xlu0 0
      %1145 = vperm.xlu0 %1144, %v1079
      %v1146 = vpop.permute.xlu0 %1145
      %1149 = vset.pattern.permute.xlu0 0
      %1150 = vperm.xlu0 %1149, %v1080
      %v1151 = vpop.permute.xlu0 %1150
      %1154 = vset.pattern.permute.xlu0 0
      %1155 = vperm.xlu0 %1154, %v1081
      %v1156 = vpop.permute.xlu0 %1155
      %1159 = vset.pattern.permute.xlu0 0
      %1160 = vperm.xlu0 %1159, %v1082
      %v1161 = vpop.permute.xlu0 %1160
      %1164 = vset.pattern.permute.xlu0 0
      %1165 = vperm.xlu0 %1164, %v1083
      %v1166 = vpop.permute.xlu0 %1165
      %1169 = vset.pattern.permute.xlu0 0
      %1170 = vperm.xlu0 %1169, %v1084
      %v1171 = vpop.permute.xlu0 %1170
      %1174 = vset.pattern.permute.xlu0 0
      %1175 = vperm.xlu0 %1174, %v1085
      %v1176 = vpop.permute.xlu0 %1175
      %1179 = vset.pattern.permute.xlu0 0
      %1180 = vperm.xlu0 %1179, %v1086
      %v1181 = vpop.permute.xlu0 %1180
      %1184 = vset.pattern.permute.xlu0 0
      %1185 = vperm.xlu0 %1184, %v1087
      %v1186 = vpop.permute.xlu0 %1185
      %1189 = vset.pattern.permute.xlu0 0
      %1190 = vperm.xlu0 %1189, %v1088
      %v1191 = vpop.permute.xlu0 %1190
      %1194 = vset.pattern.permute.xlu0 0
      %1195 = vperm.xlu0 %1194, %v1089
      %v1196 = vpop.permute.xlu0 %1195
      %1199 = vset.pattern.permute.xlu0 0
      %1200 = vperm.xlu0 %1199, %v1090
      %v1201 = vpop.permute.xlu0 %1200
      %1204 = vset.pattern.permute.xlu0 0
      %1205 = vperm.xlu0 %1204, %v1091
      %v1206 = vpop.permute.xlu0 %1205
      %1209 = vset.pattern.permute.xlu0 0
      %1210 = vperm.xlu0 %1209, %v1092
      %v1211 = vpop.permute.xlu0 %1210
      %1214 = vset.pattern.permute.xlu0 0
      %1215 = vperm.xlu0 %1214, %v1093
      %v1216 = vpop.permute.xlu0 %1215
      %1219 = vset.pattern.permute.xlu0 0
      %1220 = vperm.xlu0 %1219, %v1094
      %v1221 = vpop.permute.xlu0 %1220
      %v1223 = vsub.f32 %v953, %v1146
      %v1224 = vsub.f32 %v958, %v1151
      %v1225 = vsub.f32 %v963, %v1156
      %v1226 = vsub.f32 %v968, %v1161
      %v1227 = vsub.f32 %v973, %v1166
      %v1228 = vsub.f32 %v978, %v1171
      %v1229 = vsub.f32 %v983, %v1176
      %v1230 = vsub.f32 %v988, %v1181
      %v1231 = vsub.f32 %v993, %v1186
      %v1232 = vsub.f32 %v998, %v1191
      %v1233 = vsub.f32 %v1003, %v1196
      %v1234 = vsub.f32 %v1008, %v1201
      %v1235 = vsub.f32 %v1013, %v1206
      %v1236 = vsub.f32 %v1018, %v1211
      %v1237 = vsub.f32 %v1023, %v1216
      %v1238 = vsub.f32 %v1028, %v1221
      %v1239 = vmul.f32 %v1223, 1.442695
      %v1240 = vpow.pop %v1239
      %v1241 = vmul.f32 %v1224, 1.442695
      %v1242 = vpow.pop %v1241
      %v1243 = vmul.f32 %v1225, 1.442695
      %v1244 = vpow.pop %v1243
      %v1245 = vmul.f32 %v1226, 1.442695
      %v1246 = vpow.pop %v1245
      %v1247 = vmul.f32 %v1227, 1.442695
      %v1248 = vpow.pop %v1247
      %v1249 = vmul.f32 %v1228, 1.442695
      %v1250 = vpow.pop %v1249
      %v1251 = vmul.f32 %v1229, 1.442695
      %v1252 = vpow.pop %v1251
      %v1253 = vmul.f32 %v1230, 1.442695
      %v1254 = vpow.pop %v1253
      %v1255 = vmul.f32 %v1231, 1.442695
      %v1256 = vpow.pop %v1255
      %v1257 = vmul.f32 %v1232, 1.442695
      %v1258 = vpow.pop %v1257
      %v1259 = vmul.f32 %v1233, 1.442695
      %v1260 = vpow.pop %v1259
      %v1261 = vmul.f32 %v1234, 1.442695
      %v1262 = vpow.pop %v1261
      %v1263 = vmul.f32 %v1235, 1.442695
      %v1264 = vpow.pop %v1263
      %v1265 = vmul.f32 %v1236, 1.442695
      %v1266 = vpow.pop %v1265
      %v1267 = vmul.f32 %v1237, 1.442695
      %v1268 = vpow.pop %v1267
      %v1269 = vmul.f32 %v1238, 1.442695
      %v1270 = vpow.pop %v1269
      %v1271 = vld [vmem:[#allocation4] sm:$0xff]
      %v1272 = vld [vmem:[#allocation4 + $0x8] sm:$0xff]
      %v1273 = vld [vmem:[#allocation4 + $0x10] sm:$0xff]
      %v1274 = vld [vmem:[#allocation4 + $0x18] sm:$0xff]
      %v1275 = vld [vmem:[#allocation4 + $0x20] sm:$0xff]
      %v1276 = vld [vmem:[#allocation4 + $0x28] sm:$0xff]
      %v1277 = vld [vmem:[#allocation4 + $0x30] sm:$0xff]
      %v1278 = vld [vmem:[#allocation4 + $0x38] sm:$0xff]
      %v1279 = vld [vmem:[#allocation4 + $0x40] sm:$0xff]
      %v1280 = vld [vmem:[#allocation4 + $0x48] sm:$0xff]
      %v1281 = vld [vmem:[#allocation4 + $0x50] sm:$0xff]
      %v1282 = vld [vmem:[#allocation4 + $0x58] sm:$0xff]
      %v1283 = vld [vmem:[#allocation4 + $0x60] sm:$0xff]
      %v1284 = vld [vmem:[#allocation4 + $0x68] sm:$0xff]
      %v1285 = vld [vmem:[#allocation4 + $0x70] sm:$0xff]
      %v1286 = vld [vmem:[#allocation4 + $0x78] sm:$0xff]
      %v1287 = vmul.f32 %v1112, %v1271
      %v1288 = vmul.f32 %v1114, %v1272
      %v1289 = vmul.f32 %v1116, %v1273
      %v1290 = vmul.f32 %v1118, %v1274
      %v1291 = vmul.f32 %v1120, %v1275
      %v1292 = vmul.f32 %v1122, %v1276
      %v1293 = vmul.f32 %v1124, %v1277
      %v1294 = vmul.f32 %v1126, %v1278
      %v1295 = vmul.f32 %v1128, %v1279
      %v1296 = vmul.f32 %v1130, %v1280
      %v1297 = vmul.f32 %v1132, %v1281
      %v1298 = vmul.f32 %v1134, %v1282
      %v1299 = vmul.f32 %v1136, %v1283
      %v1300 = vmul.f32 %v1138, %v1284
      %v1301 = vmul.f32 %v1140, %v1285
      %v1302 = vmul.f32 %v1142, %v1286
      %1303 = vadd.xlane.f32.xlu0 %v1240
      %v1304 = vpop.xlane.xlu0 %1303
      %1305 = vadd.xlane.f32.xlu0 %v1242
      %v1306 = vpop.xlane.xlu0 %1305
      %1307 = vadd.xlane.f32.xlu0 %v1244
      %v1308 = vpop.xlane.xlu0 %1307
      %1309 = vadd.xlane.f32.xlu0 %v1246
      %v1310 = vpop.xlane.xlu0 %1309
      %1311 = vadd.xlane.f32.xlu0 %v1248
      %v1312 = vpop.xlane.xlu0 %1311
      %1313 = vadd.xlane.f32.xlu0 %v1250
      %v1314 = vpop.xlane.xlu0 %1313
      %1315 = vadd.xlane.f32.xlu0 %v1252
      %v1316 = vpop.xlane.xlu0 %1315
      %1317 = vadd.xlane.f32.xlu0 %v1254
      %v1318 = vpop.xlane.xlu0 %1317
      %1319 = vadd.xlane.f32.xlu0 %v1256
      %v1320 = vpop.xlane.xlu0 %1319
      %1321 = vadd.xlane.f32.xlu0 %v1258
      %v1322 = vpop.xlane.xlu0 %1321
      %1323 = vadd.xlane.f32.xlu0 %v1260
      %v1324 = vpop.xlane.xlu0 %1323
      %1325 = vadd.xlane.f32.xlu0 %v1262
      %v1326 = vpop.xlane.xlu0 %1325
      %1327 = vadd.xlane.f32.xlu0 %v1264
      %v1328 = vpop.xlane.xlu0 %1327
      %1329 = vadd.xlane.f32.xlu0 %v1266
      %v1330 = vpop.xlane.xlu0 %1329
      %1331 = vadd.xlane.f32.xlu0 %v1268
      %v1332 = vpop.xlane.xlu0 %1331
      %1333 = vadd.xlane.f32.xlu0 %v1270
      %v1334 = vpop.xlane.xlu0 %1333
      %v1335 = vadd.f32 %v1287, %v1304
      %v1336 = vadd.f32 %v1288, %v1306
      %v1337 = vadd.f32 %v1289, %v1308
      %v1338 = vadd.f32 %v1290, %v1310
      %v1339 = vadd.f32 %v1291, %v1312
      %v1340 = vadd.f32 %v1292, %v1314
      %v1341 = vadd.f32 %v1293, %v1316
      %v1342 = vadd.f32 %v1294, %v1318
      %v1343 = vadd.f32 %v1295, %v1320
      %v1344 = vadd.f32 %v1296, %v1322
      %v1345 = vadd.f32 %v1297, %v1324
      %v1346 = vadd.f32 %v1298, %v1326
      %v1347 = vadd.f32 %v1299, %v1328
      %v1348 = vadd.f32 %v1300, %v1330
      %v1349 = vadd.f32 %v1301, %v1332
      %v1350 = vadd.f32 %v1302, %v1334
      %vm1351 = vcmask 7168
      %1352 = vst.msk [vmem:[#allocation4] sm:$0xff] %vm1351, %v1335
      %1353 = vst.msk [vmem:[#allocation4 + $0x8] sm:$0xff] %vm1351, %v1336
      %1354 = vst.msk [vmem:[#allocation4 + $0x10] sm:$0xff] %vm1351, %v1337
      %1355 = vst.msk [vmem:[#allocation4 + $0x18] sm:$0xff] %vm1351, %v1338
      %1356 = vst.msk [vmem:[#allocation4 + $0x20] sm:$0xff] %vm1351, %v1339
      %1357 = vst.msk [vmem:[#allocation4 + $0x28] sm:$0xff] %vm1351, %v1340
      %1358 = vst.msk [vmem:[#allocation4 + $0x30] sm:$0xff] %vm1351, %v1341
      %1359 = vst.msk [vmem:[#allocation4 + $0x38] sm:$0xff] %vm1351, %v1342
      %1360 = vst.msk [vmem:[#allocation4 + $0x40] sm:$0xff] %vm1351, %v1343
      %1361 = vst.msk [vmem:[#allocation4 + $0x48] sm:$0xff] %vm1351, %v1344
      %1362 = vst.msk [vmem:[#allocation4 + $0x50] sm:$0xff] %vm1351, %v1345
      %1363 = vst.msk [vmem:[#allocation4 + $0x58] sm:$0xff] %vm1351, %v1346
      %1364 = vst.msk [vmem:[#allocation4 + $0x60] sm:$0xff] %vm1351, %v1347
      %1365 = vst.msk [vmem:[#allocation4 + $0x68] sm:$0xff] %vm1351, %v1348
      %1366 = vst.msk [vmem:[#allocation4 + $0x70] sm:$0xff] %vm1351, %v1349
      %1367 = vst.msk [vmem:[#allocation4 + $0x78] sm:$0xff] %vm1351, %v1350
      %v1368 = vld [vmem:[#allocation5] sm:$0xff]
      %v1369 = vld [vmem:[#allocation5 + $0x8] sm:$0xff]
      %v1370 = vld [vmem:[#allocation5 + $0x10] sm:$0xff]
      %v1371 = vld [vmem:[#allocation5 + $0x18] sm:$0xff]
      %v1372 = vld [vmem:[#allocation5 + $0x20] sm:$0xff]
      %v1373 = vld [vmem:[#allocation5 + $0x28] sm:$0xff]
      %v1374 = vld [vmem:[#allocation5 + $0x30] sm:$0xff]
      %v1375 = vld [vmem:[#allocation5 + $0x38] sm:$0xff]
      %v1376 = vld [vmem:[#allocation5 + $0x40] sm:$0xff]
      %v1377 = vld [vmem:[#allocation5 + $0x48] sm:$0xff]
      %v1378 = vld [vmem:[#allocation5 + $0x50] sm:$0xff]
      %v1379 = vld [vmem:[#allocation5 + $0x58] sm:$0xff]
      %v1380 = vld [vmem:[#allocation5 + $0x60] sm:$0xff]
      %v1381 = vld [vmem:[#allocation5 + $0x68] sm:$0xff]
      %v1382 = vld [vmem:[#allocation5 + $0x70] sm:$0xff]
      %v1383 = vld [vmem:[#allocation5 + $0x78] sm:$0xff]
      %1385 = vset.pattern.permute.xlu0 0
      %1386 = vperm.xlu0 %1385, %v1112
      %v1387 = vpop.permute.xlu0 %1386
      %1390 = vset.pattern.permute.xlu0 0
      %1391 = vperm.xlu0 %1390, %v1114
      %v1392 = vpop.permute.xlu0 %1391
      %1395 = vset.pattern.permute.xlu0 0
      %1396 = vperm.xlu0 %1395, %v1116
      %v1397 = vpop.permute.xlu0 %1396
      %1400 = vset.pattern.permute.xlu0 0
      %1401 = vperm.xlu0 %1400, %v1118
      %v1402 = vpop.permute.xlu0 %1401
      %1405 = vset.pattern.permute.xlu0 0
      %1406 = vperm.xlu0 %1405, %v1120
      %v1407 = vpop.permute.xlu0 %1406
      %1410 = vset.pattern.permute.xlu0 0
      %1411 = vperm.xlu0 %1410, %v1122
      %v1412 = vpop.permute.xlu0 %1411
      %1415 = vset.pattern.permute.xlu0 0
      %1416 = vperm.xlu0 %1415, %v1124
      %v1417 = vpop.permute.xlu0 %1416
      %1420 = vset.pattern.permute.xlu0 0
      %1421 = vperm.xlu0 %1420, %v1126
      %v1422 = vpop.permute.xlu0 %1421
      %1425 = vset.pattern.permute.xlu0 0
      %1426 = vperm.xlu0 %1425, %v1128
      %v1427 = vpop.permute.xlu0 %1426
      %1430 = vset.pattern.permute.xlu0 0
      %1431 = vperm.xlu0 %1430, %v1130
      %v1432 = vpop.permute.xlu0 %1431
      %1435 = vset.pattern.permute.xlu0 0
      %1436 = vperm.xlu0 %1435, %v1132
      %v1437 = vpop.permute.xlu0 %1436
      %1440 = vset.pattern.permute.xlu0 0
      %1441 = vperm.xlu0 %1440, %v1134
      %v1442 = vpop.permute.xlu0 %1441
      %1445 = vset.pattern.permute.xlu0 0
      %1446 = vperm.xlu0 %1445, %v1136
      %v1447 = vpop.permute.xlu0 %1446
      %1450 = vset.pattern.permute.xlu0 0
      %1451 = vperm.xlu0 %1450, %v1138
      %v1452 = vpop.permute.xlu0 %1451
      %1455 = vset.pattern.permute.xlu0 0
      %1456 = vperm.xlu0 %1455, %v1140
      %v1457 = vpop.permute.xlu0 %1456
      %1460 = vset.pattern.permute.xlu0 0
      %1461 = vperm.xlu0 %1460, %v1142
      %v1462 = vpop.permute.xlu0 %1461
      %v1464 = vmul.f32 %v1387, %v1368
      %v1465 = vmul.f32 %v1392, %v1369
      %v1466 = vmul.f32 %v1397, %v1370
      %v1467 = vmul.f32 %v1402, %v1371
      %v1468 = vmul.f32 %v1407, %v1372
      %v1469 = vmul.f32 %v1412, %v1373
      %v1470 = vmul.f32 %v1417, %v1374
      %v1471 = vmul.f32 %v1422, %v1375
      %v1472 = vmul.f32 %v1427, %v1376
      %v1473 = vmul.f32 %v1432, %v1377
      %v1474 = vmul.f32 %v1437, %v1378
      %v1475 = vmul.f32 %v1442, %v1379
      %v1476 = vmul.f32 %v1447, %v1380
      %v1477 = vmul.f32 %v1452, %v1381
      %v1478 = vmul.f32 %v1457, %v1382
      %v1479 = vmul.f32 %v1462, %v1383
      %1480 = vmatprep.subr.mxu0 0.0
      %1481 = vmatpush1.xpose.msra.mxu0 0.0
      %1482 = vmatprep.subr.mxu0 0.0
      %1483 = vmatpush1.xpose.msra.mxu0 0.0
      %1484 = vmatprep.subr.mxu0 0.0
      %1485 = vmatpush1.xpose.msra.mxu0 0.0
      %1486 = vmatprep.subr.mxu0 0.0
      %1487 = vmatpush1.xpose.msra.mxu0 0.0
      %1488 = vmatprep.subr.mxu0 0.0
      %1489 = vmatpush1.xpose.msra.mxu0 0.0
      %1490 = vmatprep.subr.mxu0 0.0
      %1491 = vmatpush1.xpose.msra.mxu0 0.0
      %1492 = vmatprep.subr.mxu0 0.0
      %1493 = vmatpush1.xpose.msra.mxu0 0.0
      %1494 = vmatprep.subr.mxu0 0.0
      %1495 = vmatpush1.xpose.msra.mxu0 0.0
      %1496 = vmatprep.subr.mxu0 0.0
      %1497 = vmatpush1.xpose.msra.mxu0 0.0
      %1498 = vmatprep.subr.mxu0 0.0
      %1499 = vmatpush1.xpose.msra.mxu0 0.0
      %1500 = vmatprep.subr.mxu0 0.0
      %1501 = vmatpush1.xpose.msra.mxu0 0.0
      %1502 = vmatprep.subr.mxu0 0.0
      %1503 = vmatpush1.xpose.msra.mxu0 0.0
      %1504 = vmatprep.subr.mxu0 0.0
      %1505 = vmatpush1.xpose.msra.mxu0 0.0
      %1506 = vmatprep.subr.mxu0 0.0
      %1507 = vmatpush1.xpose.msra.mxu0 0.0
      %1508 = vmatprep.subr.mxu0 0.0
      %1509 = vmatpush1.xpose.msra.mxu0 0.0
      %1510 = vmatprep.subr.mxu0 0.0
      %1511 = vmatpush1.xpose.msra.mxu0 %v809
      %1512 = vmatprep.subr.mxu0 0.0
      %1513 = vmatpush2.xpose.msra.mxu0 0.0
      %1514 = vmatprep.subr.mxu0 0.0
      %1515 = vmatpush2.xpose.msra.mxu0 0.0
      %1516 = vmatprep.subr.mxu0 0.0
      %1517 = vmatpush2.xpose.msra.mxu0 0.0
      %1518 = vmatprep.subr.mxu0 0.0
      %1519 = vmatpush2.xpose.msra.mxu0 0.0
      %1520 = vmatprep.subr.mxu0 0.0
      %1521 = vmatpush2.xpose.msra.mxu0 0.0
      %1522 = vmatprep.subr.mxu0 0.0
      %1523 = vmatpush2.xpose.msra.mxu0 0.0
      %1524 = vmatprep.subr.mxu0 0.0
      %1525 = vmatpush2.xpose.msra.mxu0 0.0
      %1526 = vmatprep.subr.mxu0 0.0
      %1527 = vmatpush2.xpose.msra.mxu0 0.0
      %1528 = vmatprep.subr.mxu0 0.0
      %1529 = vmatpush2.xpose.msra.mxu0 0.0
      %1530 = vmatprep.subr.mxu0 0.0
      %1531 = vmatpush2.xpose.msra.mxu0 0.0
      %1532 = vmatprep.subr.mxu0 0.0
      %1533 = vmatpush2.xpose.msra.mxu0 0.0
      %1534 = vmatprep.subr.mxu0 0.0
      %1535 = vmatpush2.xpose.msra.mxu0 0.0
      %1536 = vmatprep.subr.mxu0 0.0
      %1537 = vmatpush2.xpose.msra.mxu0 0.0
      %1538 = vmatprep.subr.mxu0 0.0
      %1539 = vmatpush2.xpose.msra.mxu0 0.0
      %1540 = vmatprep.subr.mxu0 0.0
      %1541 = vmatpush2.xpose.msra.mxu0 0.0
      %1542 = vmatprep.subr.mxu0 0.0
      %1543 = vmatpush2.xpose.msra.mxu0 0.0
      %1544 = vmatprep.mubr.f32.mxu0 0.0
      %1545 = vmatmul.mubr.f32.gmra.mxu0 %v1240
      %v1546 = vpop.f32.mrf.mxu0
      %v1547 = vadd.f32 0.0, %v1546
      %v1548 = vpop.f32.mrf.mxu0
      %1549 = vmatprep.mubr.f32.mxu0 0.0
      %1550 = vmatmul.mubr.f32.gmra.mxu0 %v1242
      %v1551 = vpop.f32.mrf.mxu0
      %v1552 = vadd.f32 0.0, %v1551
      %v1553 = vpop.f32.mrf.mxu0
      %1554 = vmatprep.mubr.f32.mxu0 0.0
      %1555 = vmatmul.mubr.f32.gmra.mxu0 %v1244
      %v1556 = vpop.f32.mrf.mxu0
      %v1557 = vadd.f32 0.0, %v1556
      %v1558 = vpop.f32.mrf.mxu0
      %1559 = vmatprep.mubr.f32.mxu0 0.0
      %1560 = vmatmul.mubr.f32.gmra.mxu0 %v1246
      %v1561 = vpop.f32.mrf.mxu0
      %v1562 = vadd.f32 0.0, %v1561
      %v1563 = vpop.f32.mrf.mxu0
      %1564 = vmatprep.mubr.f32.mxu0 0.0
      %1565 = vmatmul.mubr.f32.gmra.mxu0 %v1248
      %v1566 = vpop.f32.mrf.mxu0
      %v1567 = vadd.f32 0.0, %v1566
      %v1568 = vpop.f32.mrf.mxu0
      %1569 = vmatprep.mubr.f32.mxu0 0.0
      %1570 = vmatmul.mubr.f32.gmra.mxu0 %v1250
      %v1571 = vpop.f32.mrf.mxu0
      %v1572 = vadd.f32 0.0, %v1571
      %v1573 = vpop.f32.mrf.mxu0
      %1574 = vmatprep.mubr.f32.mxu0 0.0
      %1575 = vmatmul.mubr.f32.gmra.mxu0 %v1252
      %v1576 = vpop.f32.mrf.mxu0
      %v1577 = vadd.f32 0.0, %v1576
      %v1578 = vpop.f32.mrf.mxu0
      %1579 = vmatprep.mubr.f32.mxu0 0.0
      %1580 = vmatmul.mubr.f32.gmra.mxu0 %v1254
      %v1581 = vpop.f32.mrf.mxu0
      %v1582 = vadd.f32 0.0, %v1581
      %v1583 = vpop.f32.mrf.mxu0
      %1584 = vmatprep.mubr.f32.mxu0 0.0
      %1585 = vmatmul.mubr.f32.gmra.mxu0 %v1256
      %v1586 = vpop.f32.mrf.mxu0
      %v1587 = vadd.f32 0.0, %v1586
      %v1588 = vpop.f32.mrf.mxu0
      %1589 = vmatprep.mubr.f32.mxu0 0.0
      %1590 = vmatmul.mubr.f32.gmra.mxu0 %v1258
      %v1591 = vpop.f32.mrf.mxu0
      %v1592 = vadd.f32 0.0, %v1591
      %v1593 = vpop.f32.mrf.mxu0
      %1594 = vmatprep.mubr.f32.mxu0 0.0
      %1595 = vmatmul.mubr.f32.gmra.mxu0 %v1260
      %v1596 = vpop.f32.mrf.mxu0
      %v1597 = vadd.f32 0.0, %v1596
      %v1598 = vpop.f32.mrf.mxu0
      %1599 = vmatprep.mubr.f32.mxu0 0.0
      %1600 = vmatmul.mubr.f32.gmra.mxu0 %v1262
      %v1601 = vpop.f32.mrf.mxu0
      %v1602 = vadd.f32 0.0, %v1601
      %v1603 = vpop.f32.mrf.mxu0
      %1604 = vmatprep.mubr.f32.mxu0 0.0
      %1605 = vmatmul.mubr.f32.gmra.mxu0 %v1264
      %v1606 = vpop.f32.mrf.mxu0
      %v1607 = vadd.f32 0.0, %v1606
      %v1608 = vpop.f32.mrf.mxu0
      %1609 = vmatprep.mubr.f32.mxu0 0.0
      %1610 = vmatmul.mubr.f32.gmra.mxu0 %v1266
      %v1611 = vpop.f32.mrf.mxu0
      %v1612 = vadd.f32 0.0, %v1611
      %v1613 = vpop.f32.mrf.mxu0
      %1614 = vmatprep.mubr.f32.mxu0 0.0
      %1615 = vmatmul.mubr.f32.gmra.mxu0 %v1268
      %v1616 = vpop.f32.mrf.mxu0
      %v1617 = vadd.f32 0.0, %v1616
      %v1618 = vpop.f32.mrf.mxu0
      %1619 = vmatprep.mubr.f32.mxu0 0.0
      %1620 = vmatmul.mubr.f32.gmra.mxu0 %v1270
      %v1621 = vpop.f32.mrf.mxu0
      %v1622 = vadd.f32 0.0, %v1621
      %v1623 = vpop.f32.mrf.mxu0
      %1624 = vdwg.mxu0
      %v1625 = vadd.f32 %v1464, %v1547
      %v1626 = vadd.f32 %v1465, %v1552
      %v1627 = vadd.f32 %v1466, %v1557
      %v1628 = vadd.f32 %v1467, %v1562
      %v1629 = vadd.f32 %v1468, %v1567
      %v1630 = vadd.f32 %v1469, %v1572
      %v1631 = vadd.f32 %v1470, %v1577
      %v1632 = vadd.f32 %v1471, %v1582
      %v1633 = vadd.f32 %v1472, %v1587
      %v1634 = vadd.f32 %v1473, %v1592
      %v1635 = vadd.f32 %v1474, %v1597
      %v1636 = vadd.f32 %v1475, %v1602
      %v1637 = vadd.f32 %v1476, %v1607
      %v1638 = vadd.f32 %v1477, %v1612
      %v1639 = vadd.f32 %v1478, %v1617
      %v1640 = vadd.f32 %v1479, %v1622
      %1641 = vst.msk [vmem:[#allocation5] sm:$0xff] %vm735, %v1625
      %1642 = vst.msk [vmem:[#allocation5 + $0x8] sm:$0xff] %vm735, %v1626
      %1643 = vst.msk [vmem:[#allocation5 + $0x10] sm:$0xff] %vm735, %v1627
      %1644 = vst.msk [vmem:[#allocation5 + $0x18] sm:$0xff] %vm735, %v1628
      %1645 = vst.msk [vmem:[#allocation5 + $0x20] sm:$0xff] %vm735, %v1629
      %1646 = vst.msk [vmem:[#allocation5 + $0x28] sm:$0xff] %vm735, %v1630
      %1647 = vst.msk [vmem:[#allocation5 + $0x30] sm:$0xff] %vm735, %v1631
      %1648 = vst.msk [vmem:[#allocation5 + $0x38] sm:$0xff] %vm735, %v1632
      %1649 = vst.msk [vmem:[#allocation5 + $0x40] sm:$0xff] %vm735, %v1633
      %1650 = vst.msk [vmem:[#allocation5 + $0x48] sm:$0xff] %vm735, %v1634
      %1651 = vst.msk [vmem:[#allocation5 + $0x50] sm:$0xff] %vm735, %v1635
      %1652 = vst.msk [vmem:[#allocation5 + $0x58] sm:$0xff] %vm735, %v1636
      %1653 = vst.msk [vmem:[#allocation5 + $0x60] sm:$0xff] %vm735, %v1637
      %1654 = vst.msk [vmem:[#allocation5 + $0x68] sm:$0xff] %vm735, %v1638
      %1655 = vst.msk [vmem:[#allocation5 + $0x70] sm:$0xff] %vm735, %v1639
      %1656 = vst.msk [vmem:[#allocation5 + $0x78] sm:$0xff] %vm735, %v1640
      %1657 = vst.msk [vmem:[#allocation3] sm:$0xff] %vm1351, %v1079
      %1658 = vst.msk [vmem:[#allocation3 + $0x8] sm:$0xff] %vm1351, %v1080
      %1659 = vst.msk [vmem:[#allocation3 + $0x10] sm:$0xff] %vm1351, %v1081
      %1660 = vst.msk [vmem:[#allocation3 + $0x18] sm:$0xff] %vm1351, %v1082
      %1661 = vst.msk [vmem:[#allocation3 + $0x20] sm:$0xff] %vm1351, %v1083
      %1662 = vst.msk [vmem:[#allocation3 + $0x28] sm:$0xff] %vm1351, %v1084
      %1663 = vst.msk [vmem:[#allocation3 + $0x30] sm:$0xff] %vm1351, %v1085
      %1664 = vst.msk [vmem:[#allocation3 + $0x38] sm:$0xff] %vm1351, %v1086
      %1665 = vst.msk [vmem:[#allocation3 + $0x40] sm:$0xff] %vm1351, %v1087
      %1666 = vst.msk [vmem:[#allocation3 + $0x48] sm:$0xff] %vm1351, %v1088
      %1667 = vst.msk [vmem:[#allocation3 + $0x50] sm:$0xff] %vm1351, %v1089
      %1668 = vst.msk [vmem:[#allocation3 + $0x58] sm:$0xff] %vm1351, %v1090
      %1669 = vst.msk [vmem:[#allocation3 + $0x60] sm:$0xff] %vm1351, %v1091
      %1670 = vst.msk [vmem:[#allocation3 + $0x68] sm:$0xff] %vm1351, %v1092
      %1671 = vst.msk [vmem:[#allocation3 + $0x70] sm:$0xff] %vm1351, %v1093
      %1672 = vst.msk [vmem:[#allocation3 + $0x78] sm:$0xff] %vm1351, %v1094
      %p1673 = scmp.eq.s32.totalorder %s27, 2
      // Predicated region
      $region57: #{tpu_custom_call.1} parent=51 // pred_check
        %p1674 = pneg %p1673
      $region58: #{tpu_custom_call.1} parent=51 // pred_check_branch
        %1676 = sbr.rel (%p1674) target = $region60
      $region59: #{tpu_custom_call.1} parent=51 // pred_region
        %v1677 = vld [vmem:[#allocation4] sm:$0xff]
        %v1678 = vld [vmem:[#allocation4 + $0x8] sm:$0xff]
        %v1679 = vld [vmem:[#allocation4 + $0x10] sm:$0xff]
        %v1680 = vld [vmem:[#allocation4 + $0x18] sm:$0xff]
        %v1681 = vld [vmem:[#allocation4 + $0x20] sm:$0xff]
        %v1682 = vld [vmem:[#allocation4 + $0x28] sm:$0xff]
        %v1683 = vld [vmem:[#allocation4 + $0x30] sm:$0xff]
        %v1684 = vld [vmem:[#allocation4 + $0x38] sm:$0xff]
        %v1685 = vld [vmem:[#allocation4 + $0x40] sm:$0xff]
        %v1686 = vld [vmem:[#allocation4 + $0x48] sm:$0xff]
        %v1687 = vld [vmem:[#allocation4 + $0x50] sm:$0xff]
        %v1688 = vld [vmem:[#allocation4 + $0x58] sm:$0xff]
        %v1689 = vld [vmem:[#allocation4 + $0x60] sm:$0xff]
        %v1690 = vld [vmem:[#allocation4 + $0x68] sm:$0xff]
        %v1691 = vld [vmem:[#allocation4 + $0x70] sm:$0xff]
        %v1692 = vld [vmem:[#allocation4 + $0x78] sm:$0xff]
        %v1693 = vrcp.pop %v1677
        %v1694 = vrcp.pop %v1678
        %v1695 = vrcp.pop %v1679
        %v1696 = vrcp.pop %v1680
        %v1697 = vrcp.pop %v1681
        %v1698 = vrcp.pop %v1682
        %v1699 = vrcp.pop %v1683
        %v1700 = vrcp.pop %v1684
        %v1701 = vrcp.pop %v1685
        %v1702 = vrcp.pop %v1686
        %v1703 = vrcp.pop %v1687
        %v1704 = vrcp.pop %v1688
        %v1705 = vrcp.pop %v1689
        %v1706 = vrcp.pop %v1690
        %v1707 = vrcp.pop %v1691
        %v1708 = vrcp.pop %v1692
        %v1709 = vld [vmem:[#allocation5] sm:$0xff]
        %v1710 = vld [vmem:[#allocation5 + $0x8] sm:$0xff]
        %v1711 = vld [vmem:[#allocation5 + $0x10] sm:$0xff]
        %v1712 = vld [vmem:[#allocation5 + $0x18] sm:$0xff]
        %v1713 = vld [vmem:[#allocation5 + $0x20] sm:$0xff]
        %v1714 = vld [vmem:[#allocation5 + $0x28] sm:$0xff]
        %v1715 = vld [vmem:[#allocation5 + $0x30] sm:$0xff]
        %v1716 = vld [vmem:[#allocation5 + $0x38] sm:$0xff]
        %v1717 = vld [vmem:[#allocation5 + $0x40] sm:$0xff]
        %v1718 = vld [vmem:[#allocation5 + $0x48] sm:$0xff]
        %v1719 = vld [vmem:[#allocation5 + $0x50] sm:$0xff]
        %v1720 = vld [vmem:[#allocation5 + $0x58] sm:$0xff]
        %v1721 = vld [vmem:[#allocation5 + $0x60] sm:$0xff]
        %v1722 = vld [vmem:[#allocation5 + $0x68] sm:$0xff]
        %v1723 = vld [vmem:[#allocation5 + $0x70] sm:$0xff]
        %v1724 = vld [vmem:[#allocation5 + $0x78] sm:$0xff]
        %1726 = vset.pattern.permute.xlu0 0
        %1727 = vperm.xlu0 %1726, %v1693
        %v1728 = vpop.permute.xlu0 %1727
        %1731 = vset.pattern.permute.xlu0 0
        %1732 = vperm.xlu0 %1731, %v1694
        %v1733 = vpop.permute.xlu0 %1732
        %1736 = vset.pattern.permute.xlu0 0
        %1737 = vperm.xlu0 %1736, %v1695
        %v1738 = vpop.permute.xlu0 %1737
        %1741 = vset.pattern.permute.xlu0 0
        %1742 = vperm.xlu0 %1741, %v1696
        %v1743 = vpop.permute.xlu0 %1742
        %1746 = vset.pattern.permute.xlu0 0
        %1747 = vperm.xlu0 %1746, %v1697
        %v1748 = vpop.permute.xlu0 %1747
        %1751 = vset.pattern.permute.xlu0 0
        %1752 = vperm.xlu0 %1751, %v1698
        %v1753 = vpop.permute.xlu0 %1752
        %1756 = vset.pattern.permute.xlu0 0
        %1757 = vperm.xlu0 %1756, %v1699
        %v1758 = vpop.permute.xlu0 %1757
        %1761 = vset.pattern.permute.xlu0 0
        %1762 = vperm.xlu0 %1761, %v1700
        %v1763 = vpop.permute.xlu0 %1762
        %1766 = vset.pattern.permute.xlu0 0
        %1767 = vperm.xlu0 %1766, %v1701
        %v1768 = vpop.permute.xlu0 %1767
        %1771 = vset.pattern.permute.xlu0 0
        %1772 = vperm.xlu0 %1771, %v1702
        %v1773 = vpop.permute.xlu0 %1772
        %1776 = vset.pattern.permute.xlu0 0
        %1777 = vperm.xlu0 %1776, %v1703
        %v1778 = vpop.permute.xlu0 %1777
        %1781 = vset.pattern.permute.xlu0 0
        %1782 = vperm.xlu0 %1781, %v1704
        %v1783 = vpop.permute.xlu0 %1782
        %1786 = vset.pattern.permute.xlu0 0
        %1787 = vperm.xlu0 %1786, %v1705
        %v1788 = vpop.permute.xlu0 %1787
        %1791 = vset.pattern.permute.xlu0 0
        %1792 = vperm.xlu0 %1791, %v1706
        %v1793 = vpop.permute.xlu0 %1792
        %1796 = vset.pattern.permute.xlu0 0
        %1797 = vperm.xlu0 %1796, %v1707
        %v1798 = vpop.permute.xlu0 %1797
        %1801 = vset.pattern.permute.xlu0 0
        %1802 = vperm.xlu0 %1801, %v1708
        %v1803 = vpop.permute.xlu0 %1802
        %v1805 = vmul.f32 %v1709, %v1728
        %v1806 = vmul.f32 %v1710, %v1733
        %v1807 = vmul.f32 %v1711, %v1738
        %v1808 = vmul.f32 %v1712, %v1743
        %v1809 = vmul.f32 %v1713, %v1748
        %v1810 = vmul.f32 %v1714, %v1753
        %v1811 = vmul.f32 %v1715, %v1758
        %v1812 = vmul.f32 %v1716, %v1763
        %v1813 = vmul.f32 %v1717, %v1768
        %v1814 = vmul.f32 %v1718, %v1773
        %v1815 = vmul.f32 %v1719, %v1778
        %v1816 = vmul.f32 %v1720, %v1783
        %v1817 = vmul.f32 %v1721, %v1788
        %v1818 = vmul.f32 %v1722, %v1793
        %v1819 = vmul.f32 %v1723, %v1798
        %v1820 = vmul.f32 %v1724, %v1803
        %s1821 = sld [smem:[#allocation6]]
        %v1822 = vstv %s1821
        %v1823 = vmul.f32 %v1822, %v1805
        %v1824 = vmul.f32 %v1822, %v1806
        %v1825 = vmul.f32 %v1822, %v1807
        %v1826 = vmul.f32 %v1822, %v1808
        %v1827 = vmul.f32 %v1822, %v1809
        %v1828 = vmul.f32 %v1822, %v1810
        %v1829 = vmul.f32 %v1822, %v1811
        %v1830 = vmul.f32 %v1822, %v1812
        %v1831 = vmul.f32 %v1822, %v1813
        %v1832 = vmul.f32 %v1822, %v1814
        %v1833 = vmul.f32 %v1822, %v1815
        %v1834 = vmul.f32 %v1822, %v1816
        %v1835 = vmul.f32 %v1822, %v1817
        %v1836 = vmul.f32 %v1822, %v1818
        %v1837 = vmul.f32 %v1822, %v1819
        %v1838 = vmul.f32 %v1822, %v1820
        %v1839 = vld [vmem:[%s403] sm:$0xff]
        %v1840 = vld [vmem:[%s403 + $0x8] sm:$0xff]
        %v1841 = vld [vmem:[%s403 + $0x10] sm:$0xff]
        %v1842 = vld [vmem:[%s403 + $0x18] sm:$0xff]
        %v1843 = vld [vmem:[%s403 + $0x20] sm:$0xff]
        %v1844 = vld [vmem:[%s403 + $0x28] sm:$0xff]
        %v1845 = vld [vmem:[%s403 + $0x30] sm:$0xff]
        %v1846 = vld [vmem:[%s403 + $0x38] sm:$0xff]
        %v1847 = vld [vmem:[%s403 + $0x40] sm:$0xff]
        %v1848 = vld [vmem:[%s403 + $0x48] sm:$0xff]
        %v1849 = vld [vmem:[%s403 + $0x50] sm:$0xff]
        %v1850 = vld [vmem:[%s403 + $0x58] sm:$0xff]
        %v1851 = vld [vmem:[%s403 + $0x60] sm:$0xff]
        %v1852 = vld [vmem:[%s403 + $0x68] sm:$0xff]
        %v1853 = vld [vmem:[%s403 + $0x70] sm:$0xff]
        %v1854 = vld [vmem:[%s403 + $0x78] sm:$0xff]
        %v1855 = vadd.f32 %v1823, %v1839
        %v1856 = vadd.f32 %v1824, %v1840
        %v1857 = vadd.f32 %v1825, %v1841
        %v1858 = vadd.f32 %v1826, %v1842
        %v1859 = vadd.f32 %v1827, %v1843
        %v1860 = vadd.f32 %v1828, %v1844
        %v1861 = vadd.f32 %v1829, %v1845
        %v1862 = vadd.f32 %v1830, %v1846
        %v1863 = vadd.f32 %v1831, %v1847
        %v1864 = vadd.f32 %v1832, %v1848
        %v1865 = vadd.f32 %v1833, %v1849
        %v1866 = vadd.f32 %v1834, %v1850
        %v1867 = vadd.f32 %v1835, %v1851
        %v1868 = vadd.f32 %v1836, %v1852
        %v1869 = vadd.f32 %v1837, %v1853
        %v1870 = vadd.f32 %v1838, %v1854
        %1871 = vst.msk [vmem:[%s413] sm:$0xff] %vm735, %v1855
        %1872 = vst.msk [vmem:[%s413 + $0x8] sm:$0xff] %vm735, %v1856
        %1873 = vst.msk [vmem:[%s413 + $0x10] sm:$0xff] %vm735, %v1857
        %1874 = vst.msk [vmem:[%s413 + $0x18] sm:$0xff] %vm735, %v1858
        %1875 = vst.msk [vmem:[%s413 + $0x20] sm:$0xff] %vm735, %v1859
        %1876 = vst.msk [vmem:[%s413 + $0x28] sm:$0xff] %vm735, %v1860
        %1877 = vst.msk [vmem:[%s413 + $0x30] sm:$0xff] %vm735, %v1861
        %1878 = vst.msk [vmem:[%s413 + $0x38] sm:$0xff] %vm735, %v1862
        %1879 = vst.msk [vmem:[%s413 + $0x40] sm:$0xff] %vm735, %v1863
        %1880 = vst.msk [vmem:[%s413 + $0x48] sm:$0xff] %vm735, %v1864
        %1881 = vst.msk [vmem:[%s413 + $0x50] sm:$0xff] %vm735, %v1865
        %1882 = vst.msk [vmem:[%s413 + $0x58] sm:$0xff] %vm735, %v1866
        %1883 = vst.msk [vmem:[%s413 + $0x60] sm:$0xff] %vm735, %v1867
        %1884 = vst.msk [vmem:[%s413 + $0x68] sm:$0xff] %vm735, %v1868
        %1885 = vst.msk [vmem:[%s413 + $0x70] sm:$0xff] %vm735, %v1869
        %1886 = vst.msk [vmem:[%s413 + $0x78] sm:$0xff] %vm735, %v1870
      $region60: #{tpu_custom_call.1} parent=51 // pred_fallthru
        _
      %s1887 = smul.u32 16, %s26
      %p1888 = scmp.lt.s32.totalorder %s25, 1
      %s1889 = scalar_select %p1888, %s25, 1
      %p1890 = scmp.lt.s32.totalorder %s1887, 47
      %s1891 = scalar_select %p1890, %s1887, 47
      %s1892 = smul.addr %s1889, 48
      %s1893 = sadd.s32 %s1891, %s1892
      %s1894 = smul.addr %s1893, 8
      %s1895 = scalar_lea.vmem %s8, %s1894
      // Predicated region
      $region61: #{tpu_custom_call.1} parent=51 // pred_check
        %p1896 = pneg %p248
      $region62: #{tpu_custom_call.1} parent=51 // pred_check_branch
        %1898 = sbr.rel (%p1896) target = $region64
      $region63: #{tpu_custom_call.1} parent=51 // pred_region
        %s1899 = smul.u32 16, %s26
      $region64: #{tpu_custom_call.1} parent=51 // pred_fallthru
        _
    $region52: #{tpu_custom_call.1} parent=5 // pred_fallthru
      _
    %p1900 = scmp.le.s32.totalorder 2, %s15
    // Predicated region
    $region65: #{tpu_custom_call.1} parent=5 // pred_check
      %p1901 = pneg %p1900
    $region66: #{tpu_custom_call.1} parent=5 // pred_check_branch
      %1903 = sbr.rel (%p1901) target = $region68
    $region67: #{tpu_custom_call.1} parent=5 // pred_region
      %s1904 = ssub.s32 %s15, 2
      // Predicated region
      $region69: #{tpu_custom_call.1} parent=67 // pred_check
        %p1905 = pneg %p254
      $region70: #{tpu_custom_call.1} parent=67 // pred_check_branch
        %1907 = sbr.rel (%p1905) target = $region72
      $region71: #{tpu_custom_call.1} parent=67 // pred_region
        %s1908 = smul.u32 16, %s29
        %p1909 = scmp.lt.s32.totalorder %s28, 1
        %s1910 = scalar_select %p1909, %s28, 1
        %p1911 = scmp.lt.s32.totalorder %s1908, 47
        %s1912 = scalar_select %p1911, %s1908, 47
        %s1913 = smul.addr %s1910, 48
        %s1914 = sadd.s32 %s1912, %s1913
        %s1915 = smul.addr %s1914, 8
        %s1916 = scalar_lea.vmem %s8, %s1915
      $region72: #{tpu_custom_call.1} parent=67 // pred_fallthru
        _
    $region68: #{tpu_custom_call.1} parent=5 // pred_fallthru
      _
  $region6: #{tpu_custom_call.1} parent=0 // loop_footer
    %s19 = sadd.s32 1, %s15
  $region7: #{tpu_custom_call.1} parent=0 // loop_footer_branch
    %14 = sbr.rel target = $region3
  $region8: #{tpu_custom_call.1} parent=0 // loop_exit
    _

</llo_original>
